<compile_context>
chip_gen: v7x
topology: tpu7x:2x2x1
jax: 0.10.0
libtpu: 0.0.40
codegen_flags: <defaults>
</compile_context>

<pallas_src>
import functools
import numpy as np

import jax
import jax.numpy as jnp
from jax import lax
from jax.experimental import pallas as pl
from jax.experimental.pallas import tpu as pltpu

BN_EPS = 1e-5


# ------------------------- runtime capability probes -------------------------

@functools.lru_cache(maxsize=None)
def _strided_ds_ok():
    """Probe whether strided `pl.ds` reads from VMEM refs lower correctly."""
    def kernel(x_ref, a_ref, b_ref, c_ref):
        a_ref[...] = x_ref[pl.ds(1, 4, stride=2), :, :]     # leading-dim stride
        b_ref[...] = x_ref[:, pl.ds(1, 8, stride=2), :]     # sublane-dim stride
        c_ref[...] = x_ref[0, pl.ds(1, 8, stride=2), :]     # int squeeze + stride
    x = jnp.arange(8 * 16 * 128, dtype=jnp.float32).reshape(8, 16, 128)
    try:
        a, b, c = pl.pallas_call(
            kernel,
            out_shape=(jax.ShapeDtypeStruct((4, 16, 128), jnp.float32),
                       jax.ShapeDtypeStruct((8, 8, 128), jnp.float32),
                       jax.ShapeDtypeStruct((8, 128), jnp.float32)))(x)
        a = np.asarray(jax.block_until_ready(a))
        b, c, xn = np.asarray(b), np.asarray(c), np.asarray(x)
        return bool(np.array_equal(a, xn[1:8:2])
                    and np.array_equal(b, xn[:, 1:16:2, :])
                    and np.array_equal(c, xn[0, 1:16:2, :]))
    except Exception:
        return False


@functools.lru_cache(maxsize=None)
def _roll_mode():
    """Probe pltpu.roll on the sublane axis. Returns "np", "neg" or "off"."""
    def kernel(x_ref, o_ref):
        o_ref[...] = pltpu.roll(x_ref[...], shift=1, axis=1)
    x = jnp.arange(8 * 16 * 128, dtype=jnp.float32).reshape(8, 16, 128)
    try:
        y = pl.pallas_call(kernel, out_shape=jax.ShapeDtypeStruct(x.shape, x.dtype))(x)
        y, xn = np.asarray(jax.block_until_ready(y)), np.asarray(x)
        if np.array_equal(y, np.roll(xn, 1, axis=1)):
            return "np"           # matches np.roll: result[i] = x[i - shift]
        if np.array_equal(y, np.roll(xn, -1, axis=1)):
            return "neg"          # opposite rotation convention
    except Exception:
        pass
    return "off"                  # fall back to slice+concat shifts


# ------------------------------ in-kernel helpers -----------------------------

def _col_masks(W, pad):
    """Per-shift column validity masks (shape (1, W, 1)), hoisted out of tap loops."""
    col = lax.broadcasted_iota(jnp.int32, (1, W, 1), 1)
    return {dx: (col >= -dx) & (col < W - dx)
            for dx in range(-pad, pad + 1) if dx != 0}


def _shift_cols(v, dx, fill, masks, roll_mode):
    """result[:, w, :] = v[:, w + dx, :] if 0 <= w + dx < W else fill (W = v.shape[1])."""
    if dx == 0:
        return v
    W = v.shape[1]
    if roll_mode == "np":
        rolled = pltpu.roll(v, shift=(-dx) % W, axis=1)      # XLU sublane rotate
        return jnp.where(masks[dx], rolled, fill)
    if roll_mode == "neg":
        rolled = pltpu.roll(v, shift=dx % W, axis=1)
        return jnp.where(masks[dx], rolled, fill)
    # Fallback: aligned slice + constant block concat (no hardware roll available).
    E, C = v.shape[0], v.shape[2]
    if dx > 0:
        padb = jnp.full((E, dx, C), fill, v.dtype)
        return jnp.concatenate([v[:, dx:, :], padb], axis=1)
    padb = jnp.full((E, -dx, C), fill, v.dtype)
    return jnp.concatenate([padb, v[:, :W + dx, :]], axis=1)


def _take_rows(ref, start, n, step, strided_ok):
    """ref[start : start + n*step : step, :, :] for a 3-D VMEM ref (leading dim)."""
    if step == 1:
        return ref[start:start + n, :, :]
    if strided_ok:
        return ref[pl.ds(start, n, stride=step), :, :]
    return jnp.concatenate(
        [ref[start + i * step:start + i * step + 1, :, :] for i in range(n)], axis=0)


def _take_even_cols(ref, n_out, strided_ok):
    """ref[:, 0 : 2*n_out : 2, :] for a 3-D VMEM ref (sublane dim)."""
    if strided_ok:
        return ref[:, pl.ds(0, n_out, stride=2), :]
    return jnp.concatenate(
        [ref[:, 2 * j:2 * j + 1, :] for j in range(n_out)], axis=1)


def _depthwise(src_ref, wts, K, OH, stride, strided_ok, roll_mode):
    """Depthwise KxK conv (stride `stride` on H, stride 1 on W) of the zero-H-padded,
    already-activated input held in `src_ref` ((OH*stride + 2*(K//2), W, C) VMEM).
    Returns an (OH, W, C) f32 accumulator (W still at full resolution)."""
    pad = K // 2
    W, C = src_ref.shape[1], src_ref.shape[2]
    masks = _col_masks(W, pad) if roll_mode != "off" else None
    acc = jnp.zeros((OH, W, C), jnp.float32)
    for ky in range(K):
        rows = _take_rows(src_ref, ky, OH, stride, strided_ok)     # (OH, W, C)
        for kx in range(K):
            tap = _shift_cols(rows, kx - pad, 0.0, masks, roll_mode)
            acc = acc + tap * wts[ky * K + kx][None, None, :]
    return acc


# --------------------------------- kernels ------------------------------------

def _sepconv_kernel(x_ref, dw1_ref, pw1_ref, s1_ref, b1_ref,
                    dw2_ref, pw2_ref, s2_ref, b2_ref, o_ref,
                    *scratch, K, stride, strided_ok, roll_mode):
    """Fused SepConv: (ReLU -> dw KxK (stride) -> 1x1 -> BN) -> (same at stride 1).
    The block-1 output stays in VMEM (pad2 scratch); no HBM roundtrip."""
    pad = K // 2
    _, H, W, C = x_ref.shape
    Ho, Wo = H // stride, W // stride
    pad1_ref, pad2_ref = scratch[0], scratch[1]

    # ---- half 1: ReLU -> depthwise KxK (stride) -> 1x1 (MXU) -> BN ----
    zrow = jnp.zeros((pad, W, C), jnp.float32)
    pad1_ref[0:pad, :, :] = zrow
    pad1_ref[pad + H:H + 2 * pad, :, :] = zrow
    pad1_ref[pad:pad + H, :, :] = jnp.maximum(x_ref[0], 0.0)

    acc1 = _depthwise(pad1_ref, dw1_ref[...], K, Ho, stride, strided_ok, roll_mode)
    if stride == 2:                               # in-kernel W subsample (even cols)
        wsub_ref = scratch[2]
        wsub_ref[...] = acc1
        acc1 = _take_even_cols(wsub_ref, Wo, strided_ok)           # (Ho, Wo, C)
    h = jnp.dot(acc1.reshape(Ho * Wo, C), pw1_ref[...],
                preferred_element_type=jnp.float32)
    h = h * s1_ref[...] + b1_ref[...]                              # folded BN

    # ---- half 2: ReLU -> depthwise KxK (stride 1) -> 1x1 (MXU) -> BN ----
    zrow2 = jnp.zeros((pad, Wo, C), jnp.float32)
    pad2_ref[0:pad, :, :] = zrow2
    pad2_ref[pad + Ho:Ho + 2 * pad, :, :] = zrow2
    pad2_ref[pad:pad + Ho, :, :] = jnp.maximum(h, 0.0).reshape(Ho, Wo, C)

    acc2 = _depthwise(pad2_ref, dw2_ref[...], K, Ho, 1, strided_ok, roll_mode)
    y = jnp.dot(acc2.reshape(Ho * Wo, C), pw2_ref[...],
                preferred_element_type=jnp.float32)
    y = y * s2_ref[...] + b2_ref[...]
    o_ref[0] = y.reshape(Ho, Wo, C).astype(o_ref.dtype)


def _pool_kernel(*args, mode, stride, strided_ok, roll_mode):
    """3x3 max/avg pooling with in-kernel striding; avg uses a precomputed reciprocal
    count input (count_include_pad=False)."""
    if mode == "avg":
        x_ref, rc_ref, o_ref, *scratch = args
    else:
        x_ref, o_ref, *scratch = args
        rc_ref = None
    pad_ref = scratch[0]
    _, H, W, C = x_ref.shape
    OH, OW = H // stride, W // stride
    fill = -3.0e38 if mode == "max" else 0.0

    frow = jnp.full((1, W, C), fill, jnp.float32)
    pad_ref[0:1, :, :] = frow
    pad_ref[H + 1:H + 2, :, :] = frow
    pad_ref[1:H + 1, :, :] = x_ref[0].astype(jnp.float32)

    masks = _col_masks(W, 1) if roll_mode != "off" else None
    acc = jnp.full((OH, W, C), fill, jnp.float32)
    for ky in range(3):
        rows = _take_rows(pad_ref, ky, OH, stride, strided_ok)
        for kx in range(3):
            tap = _shift_cols(rows, kx - 1, fill, masks, roll_mode)
            acc = jnp.maximum(acc, tap) if mode == "max" else acc + tap
    if stride == 2:
        wsub_ref = scratch[1]
        wsub_ref[...] = acc
        acc = _take_even_cols(wsub_ref, OW, strided_ok)
    if mode == "avg":
        acc = acc * rc_ref[...]                   # reciprocal valid-count, (OH, OW, 1)
    o_ref[0] = acc.astype(o_ref.dtype)


def _fact_reduce_kernel(x_ref, w1_ref, w2_ref, sc_ref, bi_ref, o_ref, *, strided_ok):
    """FactorizedReduce: single read of x; even/odd spatial subsample done in-kernel.
    x_ref is (1, Ho, 2, W, Cin): H was pre-split into (Ho, 2) by a free reshape."""
    _, Ho, _, W, Cin = x_ref.shape
    Wo = W // 2

    def phase(row_phase, col_phase):
        if strided_ok:
            v = x_ref[0, :, row_phase, pl.ds(col_phase, Wo, stride=2), :]
        else:
            v = jnp.concatenate(
                [x_ref[0, :, row_phase, 2 * j + col_phase:2 * j + col_phase + 1, :]
                 for j in range(Wo)], axis=1)
        return jnp.maximum(v, 0.0)                # ReLU

    xe = phase(0, 0)                              # conv_1 path: rows 0::2, cols 0::2
    xo = phase(1, 1)                              # conv_2 path: rows 1::2, cols 1::2
    y1 = jnp.dot(xe.reshape(Ho * Wo, Cin), w1_ref[...],
                 preferred_element_type=jnp.float32)
    y2 = jnp.dot(xo.reshape(Ho * Wo, Cin), w2_ref[...],
                 preferred_element_type=jnp.float32)
    y = jnp.concatenate([y1, y2], axis=-1) * sc_ref[...] + bi_ref[...]   # folded BN
    o_ref[0] = y.reshape(Ho, Wo, -1).astype(o_ref.dtype)


# --------------------------------- wrappers ------------------------------------
# Note: grid is only over batch; at production H*W*C add an H grid axis (with halo)
# and size blocks against the 64 MiB v7x VMEM; bf16 activations would further halve
# HBM traffic on v6e/v7x. Not needed at these test shapes.

def _avg_pool_rcount(H, W, stride):
    """Reciprocal of the valid-element count per output pixel (count_include_pad=False)."""
    oy = np.arange(H // stride) * stride
    ox = np.arange(W // stride) * stride
    cy = np.minimum(oy + 1, H - 1) - np.maximum(oy - 1, 0) + 1
    cx = np.minimum(ox + 1, W - 1) - np.maximum(ox - 1, 0) + 1
    cnt = cy[:, None] * cx[None, :]
    return jnp.asarray((1.0 / cnt)[..., None], jnp.float32)      # (OH, OW, 1)


def pallas_sepconv(x, params, ksize, stride):
    N, H, W, C = x.shape
    Ho, Wo = H // stride, W // stride
    pad = ksize // 2
    strided_ok, roll_mode = _strided_ds_ok(), _roll_mode()
    scratch = [pltpu.VMEM((H + 2 * pad, W, C), jnp.float32),
               pltpu.VMEM((Ho + 2 * pad, Wo, C), jnp.float32)]
    if stride == 2:
        scratch.append(pltpu.VMEM((Ho, W, C), jnp.float32))
    kern = functools.partial(_sepconv_kernel, K=ksize, stride=stride,
                             strided_ok=strided_ok, roll_mode=roll_mode)

    def wspec(arr):
        return pl.BlockSpec(arr.shape, lambda n: (0,) * arr.ndim)

    p = params
    return pl.pallas_call(
        kern,
        out_shape=jax.ShapeDtypeStruct((N, Ho, Wo, C), x.dtype),
        grid=(N,),
        in_specs=[pl.BlockSpec((1, H, W, C), lambda n: (n, 0, 0, 0)),
                  wspec(p["dw1"]), wspec(p["pw1"]), wspec(p["bn1_s"]), wspec(p["bn1_b"]),
                  wspec(p["dw2"]), wspec(p["pw2"]), wspec(p["bn2_s"]), wspec(p["bn2_b"])],
        out_specs=pl.BlockSpec((1, Ho, Wo, C), lambda n: (n, 0, 0, 0)),
        scratch_shapes=scratch,
        compiler_params=pltpu.CompilerParams(dimension_semantics=("parallel",)),
    )(x, p["dw1"], p["pw1"], p["bn1_s"], p["bn1_b"],
      p["dw2"], p["pw2"], p["bn2_s"], p["bn2_b"])


def pallas_pool(x, mode, stride):
    N, H, W, C = x.shape
    OH, OW = H // stride, W // stride
    strided_ok, roll_mode = _strided_ds_ok(), _roll_mode()
    kern = functools.partial(_pool_kernel, mode=mode, stride=stride,
                             strided_ok=strided_ok, roll_mode=roll_mode)
    in_specs = [pl.BlockSpec((1, H, W, C), lambda n: (n, 0, 0, 0))]
    args = [x]
    if mode == "avg":
        rc = _avg_pool_rcount(H, W, stride)
        in_specs.append(pl.BlockSpec(rc.shape, lambda n: (0, 0, 0)))
        args.append(rc)
    scratch = [pltpu.VMEM((H + 2, W, C), jnp.float32)]
    if stride == 2:
        scratch.append(pltpu.VMEM((OH, W, C), jnp.float32))
    return pl.pallas_call(
        kern,
        out_shape=jax.ShapeDtypeStruct((N, OH, OW, C), x.dtype),
        grid=(N,),
        in_specs=in_specs,
        out_specs=pl.BlockSpec((1, OH, OW, C), lambda n: (n, 0, 0, 0)),
        scratch_shapes=scratch,
        compiler_params=pltpu.CompilerParams(dimension_semantics=("parallel",)),
    )(*args)


def pallas_fact_reduce(x, w1, w2, scale, bias):
    N, H, W, Cin = x.shape
    Ho, Wo = H // 2, W // 2
    Cout = w1.shape[1] + w2.shape[1]
    strided_ok = _strided_ds_ok()
    xr = x.reshape(N, Ho, 2, W, Cin)          # free (bitcast) reshape: H -> (Ho, 2)
    kern = functools.partial(_fact_reduce_kernel, strided_ok=strided_ok)

    def wspec(arr):
        return pl.BlockSpec(arr.shape, lambda n: (0,) * arr.ndim)

    return pl.pallas_call(
        kern,
        out_shape=jax.ShapeDtypeStruct((N, Ho, Wo, Cout), x.dtype),
        grid=(N,),
        in_specs=[pl.BlockSpec((1, Ho, 2, W, Cin), lambda n: (n, 0, 0, 0, 0)),
                  wspec(w1), wspec(w2), wspec(scale), wspec(bias)],
        out_specs=pl.BlockSpec((1, Ho, Wo, Cout), lambda n: (n, 0, 0, 0)),
        compiler_params=pltpu.CompilerParams(dimension_semantics=("parallel",)),
    )(xr, w1, w2, scale, bias)


# --------------------------------- Node ------------------------------------

class NodePallas:
    """Inference-mode port of Node. `shape` is [H, W, C] as in the PyTorch code."""

    def __init__(self, op, shape, channels, stride=1, drop_path_keep_prob=None,
                 layer_id=0, layers=0, steps=0, key=None):
        key = jax.random.PRNGKey(0) if key is None else key
        self.op_name = op
        self.channels = channels
        self.stride = stride
        self.drop_path_keep_prob = drop_path_keep_prob
        H, W, Cin = list(shape)
        self.params = {}

        def bn_scale(c):
            return jnp.full((1, c), 1.0 / np.sqrt(1.0 + BN_EPS), jnp.float32)

        def bn_bias(c):
            return jnp.zeros((1, c), jnp.float32)

        if op in ("seqconv3x3", "seqconv5x5"):
            assert Cin == channels
            k = 3 if op == "seqconv3x3" else 5
            self.ksize = k
            k0, k1, k2, k3 = jax.random.split(key, 4)
            self.params = dict(
                dw1=0.1 * jax.random.normal(k0, (k * k, channels), jnp.float32),
                pw1=0.1 * jax.random.normal(k1, (channels, channels), jnp.float32),
                dw2=0.1 * jax.random.normal(k2, (k * k, channels), jnp.float32),
                pw2=0.1 * jax.random.normal(k3, (channels, channels), jnp.float32),
                bn1_s=bn_scale(channels), bn1_b=bn_bias(channels),
                bn2_s=bn_scale(channels), bn2_b=bn_bias(channels),
            )
            self.out_shape = [H // stride, W // stride, channels]
        elif op in ("avgpool3x3", "maxpool3x3"):
            self.out_shape = [H // stride, W // stride, Cin]
        elif op == "identity":
            if stride > 1:
                assert stride == 2
                half = channels // 2
                k0, k1 = jax.random.split(key)
                self.params = dict(
                    w1=0.1 * jax.random.normal(k0, (Cin, half), jnp.float32),
                    w2=0.1 * jax.random.normal(k1, (Cin, channels - half), jnp.float32),
                    bn_s=bn_scale(channels), bn_b=bn_bias(channels),
                )
                self.out_shape = [H // stride, W // stride, channels]
            else:
                self.out_shape = [H, W, Cin]
        else:
            raise ValueError(f"unsupported op: {op}")

    def __call__(self, x, step=0):
        p = self.params
        if self.op_name in ("seqconv3x3", "seqconv5x5"):
            out = pallas_sepconv(x, p, self.ksize, self.stride)   # fused pair, 1 call
        elif self.op_name == "avgpool3x3":
            out = pallas_pool(x, "avg", self.stride)
        elif self.op_name == "maxpool3x3":
            out = pallas_pool(x, "max", self.stride)
        else:  # identity
            out = x
            if self.stride > 1:
                out = pallas_fact_reduce(out, p["w1"], p["w2"], p["bn_s"], p["bn_b"])
        # DropPath_ applies only when self.training is True -> no-op at inference.
        return out


# ---------------------------- plain-JAX references --------------------------

def ref_pool(x, mode, stride):
    pad = [(0, 0), (1, 1), (1, 1), (0, 0)]
    win = (1, 3, 3, 1)
    strides = (1, stride, stride, 1)
    if mode == "max":
        return lax.reduce_window(x, jnp.float32(-jnp.inf), lax.max, win, strides, pad)
    s = lax.reduce_window(x, jnp.float32(0.0), lax.add, win, strides, pad)
    c = lax.reduce_window(jnp.ones_like(x), jnp.float32(0.0), lax.add, win, strides, pad)
    return s / c


def ref_fact_reduce(x, w1, w2, scale, bias):
    x = jnp.maximum(x, 0.0)
    a = x[:, 0::2, 0::2, :]
    b = x[:, 1::2, 1::2, :]
    y = jnp.concatenate([jnp.einsum("nhwc,cd->nhwd", a, w1),
                         jnp.einsum("nhwc,cd->nhwd", b, w2)], axis=-1)
    return y * scale.reshape(1, 1, 1, -1) + bias.reshape(1, 1, 1, -1)


def ref_sep_block(x, dw, pw, scale, bias, ksize, stride):
    C = x.shape[-1]
    x = jnp.maximum(x, 0.0)
    rhs = dw.reshape(ksize, ksize, C)[:, :, None, :]         # (K,K,1,C) HWIO, grouped
    pad = ksize // 2
    y = lax.conv_general_dilated(
        x, rhs, (stride, stride), [(pad, pad), (pad, pad)],
        dimension_numbers=("NHWC", "HWIO", "NHWC"), feature_group_count=C)
    y = jnp.einsum("nhwc,cd->nhwd", y, pw)
    return y * scale.reshape(1, 1, 1, -1) + bias.reshape(1, 1, 1, -1)


# ----------------------------------- main -----------------------------------

if __name__ == "__main__":
    key = jax.random.PRNGKey(0)
    kx, kp = jax.random.split(key)
    N, H, W, C = 2, 16, 16, 32
    x = jax.random.normal(kx, (N, H, W, C), jnp.float32)

    cases = [
        ("maxpool3x3", 1), ("maxpool3x3", 2),
        ("avgpool3x3", 1), ("avgpool3x3", 2),
        ("identity", 1), ("identity", 2),
        ("seqconv3x3", 1), ("seqconv3x3", 2),
        ("seqconv5x5", 2),
    ]

    for op, stride in cases:
        node = NodePallas(op, [H, W, C], C, stride=stride, key=kp)
        out = jax.block_until_ready(node(x, step=0))
        assert out.shape == (N,) + tuple(node.out_shape), (op, stride, out.shape)

        p = node.params
        if op == "maxpool3x3":
            ref, rtol, atol = ref_pool(x, "max", stride), 1e-5, 1e-5
        elif op == "avgpool3x3":
            ref, rtol, atol = ref_pool(x, "avg", stride), 1e-5, 1e-5
        elif op == "identity":
            if stride == 1:
                ref, rtol, atol = x, 0, 0
            else:
                ref = ref_fact_reduce(x, p["w1"], p["w2"], p["bn_s"], p["bn_b"])
                rtol, atol = 2e-2, 2e-2
        else:  # seqconv
            r = ref_sep_block(x, p["dw1"], p["pw1"], p["bn1_s"], p["bn1_b"],
                              node.ksize, stride)
            ref = ref_sep_block(r, p["dw2"], p["pw2"], p["bn2_s"], p["bn2_b"],
                                node.ksize, 1)
            rtol, atol = 2e-2, 2e-2

        np.testing.assert_allclose(np.asarray(out), np.asarray(ref),
                                   rtol=rtol, atol=atol,
                                   err_msg=f"{op} stride={stride}")

    print("KERNEL_OK")
</pallas_src>

<mosaic_0001>
module attributes {stable_mosaic.version = 11 : i64} {
  func.func @kernel(%arg0: memref<8x16x128xf32, #tpu.memory_space<vmem>>, %arg1: memref<4x16x128xf32, #tpu.memory_space<vmem>>, %arg2: memref<8x8x128xf32, #tpu.memory_space<vmem>>, %arg3: memref<8x128xf32, #tpu.memory_space<vmem>>) attributes {dimension_semantics = [], scalar_prefetch = 0 : i64, scratch_operands = 0 : i64, tpu.core_type = #tpu.core_type<tc>} {
    %c1 = arith.constant 1 : index
    %c0 = arith.constant 0 : index
    %c0_0 = arith.constant 0 : index
    %0 = tpu.strided_load %arg0[%c1, %c0, %c0_0] {strides = array<i32: 2, 1, 1>} : memref<8x16x128xf32, #tpu.memory_space<vmem>>, vector<4x16x128xf32>
    %c0_1 = arith.constant 0 : index
    %c0_2 = arith.constant 0 : index
    %c0_3 = arith.constant 0 : index
    %1 = vector.load %arg1[%c0_1, %c0_2, %c0_3] : memref<4x16x128xf32, #tpu.memory_space<vmem>>, vector<4x16x128xf32>
    tpu.vector_store %arg1[%c0_1, %c0_2, %c0_3], %0 {strides = array<i32>} : memref<4x16x128xf32, #tpu.memory_space<vmem>>, vector<4x16x128xf32>,
    %c0_4 = arith.constant 0 : index
    %c1_5 = arith.constant 1 : index
    %c0_6 = arith.constant 0 : index
    %2 = tpu.strided_load %arg0[%c0_4, %c1_5, %c0_6] {strides = array<i32: 1, 2, 1>} : memref<8x16x128xf32, #tpu.memory_space<vmem>>, vector<8x8x128xf32>
    %c0_7 = arith.constant 0 : index
    %c0_8 = arith.constant 0 : index
    %c0_9 = arith.constant 0 : index
    %3 = vector.load %arg2[%c0_7, %c0_8, %c0_9] : memref<8x8x128xf32, #tpu.memory_space<vmem>>, vector<8x8x128xf32>
    tpu.vector_store %arg2[%c0_7, %c0_8, %c0_9], %2 {strides = array<i32>} : memref<8x8x128xf32, #tpu.memory_space<vmem>>, vector<8x8x128xf32>,
    %c0_10 = arith.constant 0 : index
    %c1_11 = arith.constant 1 : index
    %c0_12 = arith.constant 0 : index
    %4 = tpu.strided_load %arg0[%c0_10, %c1_11, %c0_12] {strides = array<i32: 1, 2, 1>} : memref<8x16x128xf32, #tpu.memory_space<vmem>>, vector<1x8x128xf32>
    %5 = vector.shape_cast %4 : vector<1x8x128xf32> to vector<8x128xf32>
    %c0_13 = arith.constant 0 : index
    %c0_14 = arith.constant 0 : index
    %6 = vector.load %arg3[%c0_13, %c0_14] : memref<8x128xf32, #tpu.memory_space<vmem>>, vector<8x128xf32>
    tpu.vector_store %arg3[%c0_13, %c0_14], %5 {strides = array<i32>} : memref<8x128xf32, #tpu.memory_space<vmem>>, vector<8x128xf32>,
    return
  }
}

module attributes {stable_mosaic.version = 11 : i64} {
  func.func @kernel(%arg0: memref<8x16x128xf32, #tpu.memory_space<vmem>>, %arg1: memref<8x16x128xf32, #tpu.memory_space<vmem>>) attributes {dimension_semantics = [], scalar_prefetch = 0 : i64, scratch_operands = 0 : i64, tpu.core_type = #tpu.core_type<tc>} {
    %c0 = arith.constant 0 : index
    %c0_0 = arith.constant 0 : index
    %c0_1 = arith.constant 0 : index
    %0 = vector.load %arg0[%c0, %c0_0, %c0_1] : memref<8x16x128xf32, #tpu.memory_space<vmem>>, vector<8x16x128xf32>
    %c1_i32 = arith.constant 1 : i32
    %1 = tpu.dynamic_rotate %0 by %c1_i32 dim 1 : vector<8x16x128xf32>, i32 -> vector<8x16x128xf32>
    %c0_2 = arith.constant 0 : index
    %c0_3 = arith.constant 0 : index
    %c0_4 = arith.constant 0 : index
    %2 = vector.load %arg1[%c0_2, %c0_3, %c0_4] : memref<8x16x128xf32, #tpu.memory_space<vmem>>, vector<8x16x128xf32>
    tpu.vector_store %arg1[%c0_2, %c0_3, %c0_4], %1 {strides = array<i32>} : memref<8x16x128xf32, #tpu.memory_space<vmem>>, vector<8x16x128xf32>,
    return
  }
}

module attributes {stable_mosaic.version = 11 : i64} {
  func.func @_pool_kernel(%arg0: i32, %arg1: memref<1x16x16x32xf32, #tpu.memory_space<vmem>>, %arg2: memref<1x16x16x32xf32, #tpu.memory_space<vmem>>, %arg3: memref<18x16x32xf32, #tpu.memory_space<vmem>>) attributes {dimension_semantics = [#tpu.dimension_semantics<parallel>], iteration_bounds = array<i64: 2>, scalar_prefetch = 0 : i64, scratch_operands = 1 : i64, tpu.core_type = #tpu.core_type<tc>, window_params = [{transform_indices = @transform_0, window_bounds = array<i64: 1, 16, 16, 32>}, {transform_indices = @transform_1, window_bounds = array<i64: 1, 16, 16, 32>}]} {
    %cst = arith.constant -3.000000e+38 : f32
    %0 = vector.broadcast %cst : f32 to vector<1x16x32xf32>
    %c0 = arith.constant 0 : index
    %c0_0 = arith.constant 0 : index
    %c0_1 = arith.constant 0 : index
    %1 = vector.load %arg3[%c0, %c0_0, %c0_1] : memref<18x16x32xf32, #tpu.memory_space<vmem>>, vector<1x16x32xf32>
    tpu.vector_store %arg3[%c0, %c0_0, %c0_1], %0 {strides = array<i32>} : memref<18x16x32xf32, #tpu.memory_space<vmem>>, vector<1x16x32xf32>,
    %c17 = arith.constant 17 : index
    %c0_2 = arith.constant 0 : index
    %c0_3 = arith.constant 0 : index
    %2 = vector.load %arg3[%c17, %c0_2, %c0_3] : memref<18x16x32xf32, #tpu.memory_space<vmem>>, vector<1x16x32xf32>
    tpu.vector_store %arg3[%c17, %c0_2, %c0_3], %0 {strides = array<i32>} : memref<18x16x32xf32, #tpu.memory_space<vmem>>, vector<1x16x32xf32>,
    %c0_4 = arith.constant 0 : index
    %c0_5 = arith.constant 0 : index
    %c0_6 = arith.constant 0 : index
    %c0_7 = arith.constant 0 : index
    %3 = vector.load %arg1[%c0_4, %c0_5, %c0_6, %c0_7] : memref<1x16x16x32xf32, #tpu.memory_space<vmem>>, vector<1x16x16x32xf32>
    %4 = vector.shape_cast %3 : vector<1x16x16x32xf32> to vector<16x16x32xf32>
    %c1 = arith.constant 1 : index
    %c0_8 = arith.constant 0 : index
    %c0_9 = arith.constant 0 : index
    %5 = vector.load %arg3[%c1, %c0_8, %c0_9] : memref<18x16x32xf32, #tpu.memory_space<vmem>>, vector<16x16x32xf32>
    tpu.vector_store %arg3[%c1, %c0_8, %c0_9], %4 {strides = array<i32>} : memref<18x16x32xf32, #tpu.memory_space<vmem>>, vector<16x16x32xf32>,
    %cst_10 = arith.constant -3.000000e+38 : f32
    %6 = vector.broadcast %cst_10 : f32 to vector<16x16x32xf32>
    %c0_11 = arith.constant 0 : index
    %c0_12 = arith.constant 0 : index
    %c0_13 = arith.constant 0 : index
    %7 = vector.load %arg3[%c0_11, %c0_12, %c0_13] : memref<18x16x32xf32, #tpu.memory_space<vmem>>, vector<16x16x32xf32>
    %cst_14 = arith.constant -3.000000e+38 : f32
    %8 = vector.broadcast %cst_14 : f32 to vector<16x1x32xf32>
    %9 = vector.extract_strided_slice %7 {offsets = [0, 0, 0], sizes = [16, 15, 32], strides = [1, 1, 1]} : vector<16x16x32xf32> to vector<16x15x32xf32>
    %10 = tpu.concatenate %8, %9 in 1 : vector<16x1x32xf32>, vector<16x15x32xf32> -> vector<16x16x32xf32>
    %11 = arith.maximumf %6, %10 : vector<16x16x32xf32>
    %12 = arith.maximumf %11, %7 : vector<16x16x32xf32>
    %cst_15 = arith.constant -3.000000e+38 : f32
    %13 = vector.broadcast %cst_15 : f32 to vector<16x1x32xf32>
    %14 = vector.extract_strided_slice %7 {offsets = [0, 1, 0], sizes = [16, 15, 32], strides = [1, 1, 1]} : vector<16x16x32xf32> to vector<16x15x32xf32>
    %15 = tpu.concatenate %14, %13 in 1 : vector<16x15x32xf32>, vector<16x1x32xf32> -> vector<16x16x32xf32>
    %16 = arith.maximumf %12, %15 : vector<16x16x32xf32>
    %c1_16 = arith.constant 1 : index
    %c0_17 = arith.constant 0 : index
    %c0_18 = arith.constant 0 : index
    %17 = vector.load %arg3[%c1_16, %c0_17, %c0_18] : memref<18x16x32xf32, #tpu.memory_space<vmem>>, vector<16x16x32xf32>
    %cst_19 = arith.constant -3.000000e+38 : f32
    %18 = vector.broadcast %cst_19 : f32 to vector<16x1x32xf32>
    %19 = vector.extract_strided_slice %17 {offsets = [0, 0, 0], sizes = [16, 15, 32], strides = [1, 1, 1]} : vector<16x16x32xf32> to vector<16x15x32xf32>
    %20 = tpu.concatenate %18, %19 in 1 : vector<16x1x32xf32>, vector<16x15x32xf32> -> vector<16x16x32xf32>
    %21 = arith.maximumf %16, %20 : vector<16x16x32xf32>
    %22 = arith.maximumf %21, %17 : vector<16x16x32xf32>
    %cst_20 = arith.constant -3.000000e+38 : f32
    %23 = vector.broadcast %cst_20 : f32 to vector<16x1x32xf32>
    %24 = vector.extract_strided_slice %17 {offsets = [0, 1, 0], sizes = [16, 15, 32], strides = [1, 1, 1]} : vector<16x16x32xf32> to vector<16x15x32xf32>
    %25 = tpu.concatenate %24, %23 in 1 : vector<16x15x32xf32>, vector<16x1x32xf32> -> vector<16x16x32xf32>
    %26 = arith.maximumf %22, %25 : vector<16x16x32xf32>
    %c2 = arith.constant 2 : index
    %c0_21 = arith.constant 0 : index
    %c0_22 = arith.constant 0 : index
    %27 = vector.load %arg3[%c2, %c0_21, %c0_22] : memref<18x16x32xf32, #tpu.memory_space<vmem>>, vector<16x16x32xf32>
    %cst_23 = arith.constant -3.000000e+38 : f32
    %28 = vector.broadcast %cst_23 : f32 to vector<16x1x32xf32>
    %29 = vector.extract_strided_slice %27 {offsets = [0, 0, 0], sizes = [16, 15, 32], strides = [1, 1, 1]} : vector<16x16x32xf32> to vector<16x15x32xf32>
    %30 = tpu.concatenate %28, %29 in 1 : vector<16x1x32xf32>, vector<16x15x32xf32> -> vector<16x16x32xf32>
    %31 = arith.maximumf %26, %30 : vector<16x16x32xf32>
    %32 = arith.maximumf %31, %27 : vector<16x16x32xf32>
    %cst_24 = arith.constant -3.000000e+38 : f32
    %33 = vector.broadcast %cst_24 : f32 to vector<16x1x32xf32>
    %34 = vector.extract_strided_slice %27 {offsets = [0, 1, 0], sizes = [16, 15, 32], strides = [1, 1, 1]} : vector<16x16x32xf32> to vector<16x15x32xf32>
    %35 = tpu.concatenate %34, %33 in 1 : vector<16x15x32xf32>, vector<16x1x32xf32> -> vector<16x16x32xf32>
    %36 = arith.maximumf %32, %35 : vector<16x16x32xf32>
    %c0_25 = arith.constant 0 : index
    %c0_26 = arith.constant 0 : index
    %c0_27 = arith.constant 0 : index
    %c0_28 = arith.constant 0 : index
    %37 = vector.load %arg2[%c0_25, %c0_26, %c0_27, %c0_28] : memref<1x16x16x32xf32, #tpu.memory_space<vmem>>, vector<1x16x16x32xf32>
    %38 = vector.shape_cast %37 : vector<1x16x16x32xf32> to vector<16x16x32xf32>
    %39 = vector.shape_cast %36 : vector<16x16x32xf32> to vector<1x16x16x32xf32>
    tpu.vector_store %arg2[%c0_25, %c0_26, %c0_27, %c0_28], %39 {strides = array<i32>} : memref<1x16x16x32xf32, #tpu.memory_space<vmem>>, vector<1x16x16x32xf32>,
    return
  }
  func.func @transform_0(%arg0: i32) -> (i32, i32, i32, i32) {
    %c0_i32 = arith.constant 0 : i32
    %c0_i32_0 = arith.constant 0 : i32
    %c0_i32_1 = arith.constant 0 : i32
    %c0_i32_2 = arith.constant 0 : i32
    return %arg0, %c0_i32, %c0_i32_0, %c0_i32_1 : i32, i32, i32, i32
  }
  func.func @transform_1(%arg0: i32) -> (i32, i32, i32, i32) {
    %c0_i32 = arith.constant 0 : i32
    %c0_i32_0 = arith.constant 0 : i32
    %c0_i32_1 = arith.constant 0 : i32
    %c0_i32_2 = arith.constant 0 : i32
    return %arg0, %c0_i32, %c0_i32_0, %c0_i32_1 : i32, i32, i32, i32
  }
}

</mosaic_0001>

<llo_original>
// kernel: tpu_custom_call.1
$region0: #{tpu_custom_call.1}
  #allocation0 [shape = 'u32[]', space=smem, size = 0x4, offset = 0x4, fixed_abs, tag = 'smem constant byte address 0x4 - core index']
  #allocation1 [shape = 'u32[144,128]{1,0:T(1,128)}', space=vmem, size = 0x12000, scoped, tag = 'internal scratch']
  %s0 = inlined_call_operand.hbm [shape: f32[8,16,128], index: 0, kind: input, shape index: {}]
  %s1 = inlined_call_operand.hbm [shape: f32[4,16,128], index: 1, kind: output, shape index: {0}]
  %s2 = inlined_call_operand.hbm [shape: f32[8,8,128], index: 2, kind: output, shape index: {1}]
  %s3 = inlined_call_operand.hbm [shape: f32[8,128], index: 3, kind: output, shape index: {2}]
  %4 = xla_tuple %s1, %s2, %s3
  %s5 = sld [smem:[#allocation0]]
  $region34: #{tpu_custom_call.1} parent=0
    _
  %s7 = ssub.s32 1, %s5
  %s8 = scalar_select 0, %s7, %s5
  $region1: #{tpu_custom_call.1} parent=0
    #allocation2 [shape = 'u8[65536]{0}', space=vmem, size = 0x10000, scoped, tag = 'input window, operand 0, single buffered']
    #allocation3 [shape = 's32[1]{0}', space=sflag, size = 0x4, scoped, tag = 'scoped memory for tpu_custom_call.1']
    #allocation4 [shape = 's32[1]{0}', space=sflag, size = 0x4, scoped, tag = 'scoped memory for tpu_custom_call.1']
    #allocation5 [shape = 'u8[32768]{0}', space=vmem, size = 0x8000, scoped, tag = 'output window, operand 0, single buffered']
    #allocation6 [shape = 'u8[32768]{0}', space=vmem, size = 0x8000, scoped, tag = 'output window, operand 1, single buffered']
    #allocation7 [shape = 's32[1]{0}', space=sflag, size = 0x4, scoped, tag = 'scoped memory for tpu_custom_call.1']
    #allocation8 [shape = 'u8[4096]{0}', space=vmem, size = 0x1000, scoped, tag = 'output window, operand 2, single buffered']
    %9 = vsyncpa [#allocation3], 0
    %10 = vsyncpa [#allocation4], 0
    %11 = vsyncpa [#allocation7], 0
    // Predicated region
    $region2: #{tpu_custom_call.1} parent=1 // pred_check
      _
    $region3: #{tpu_custom_call.1} parent=1 // pred_check_branch
      %13 = sbr.rel (0) target = $region5
    $region4: #{tpu_custom_call.1} parent=1 // pred_region
      %s15 = ssub.s32 2048, 2048
      %16 = vsyncadd [#allocation3], %s15
      %s17 = sshll.u32 [#allocation2], 4
      %s18 = int_to_ptr.vmem [resolvable:$true] %s17
      %23 = dma.hbm_to_vmem [thread:$0]  %s0, 2048, %s18, [#allocation3], 128, 128, 8
    $region5: #{tpu_custom_call.1} parent=1 // pred_fallthru
      _
    // Predicated region
    $region6: #{tpu_custom_call.1} parent=1 // pred_check
      _
    $region7: #{tpu_custom_call.1} parent=1 // pred_check_branch
      %25 = sbr.rel (0) target = $region9
    $region8: #{tpu_custom_call.1} parent=1 // pred_region
      %26 = dma.done [#allocation3], 2048
    $region9: #{tpu_custom_call.1} parent=1 // pred_fallthru
      _
    %s27 = scalar_lea.vmem [#allocation2], 16
    %v28 = vld [vmem:[%s27] sm:$0xff]
    %v29 = vld [vmem:[%s27 + $0x8] sm:$0xff]
    %v30 = vld [vmem:[%s27 + $0x20] sm:$0xff]
    %v31 = vld [vmem:[%s27 + $0x28] sm:$0xff]
    %v32 = vld [vmem:[%s27 + $0x40] sm:$0xff]
    %v33 = vld [vmem:[%s27 + $0x48] sm:$0xff]
    %v34 = vld [vmem:[%s27 + $0x60] sm:$0xff]
    %v35 = vld [vmem:[%s27 + $0x68] sm:$0xff]
    %36 = vst [vmem:[#allocation5] sm:$0xff] %v28
    %37 = vst [vmem:[#allocation5 + $0x8] sm:$0xff] %v29
    %38 = vst [vmem:[#allocation5 + $0x10] sm:$0xff] %v30
    %39 = vst [vmem:[#allocation5 + $0x18] sm:$0xff] %v31
    %40 = vst [vmem:[#allocation5 + $0x20] sm:$0xff] %v32
    %41 = vst [vmem:[#allocation5 + $0x28] sm:$0xff] %v33
    %42 = vst [vmem:[#allocation5 + $0x30] sm:$0xff] %v34
    %43 = vst [vmem:[#allocation5 + $0x38] sm:$0xff] %v35
    %s44 = scalar_lea.vmem [#allocation2], 1
    %v45 = vld [vmem:[%s44] ss:$2 sm:$0xff]
    %s46 = scalar_lea.vmem [#allocation2], 17
    %v47 = vld [vmem:[%s46] ss:$2 sm:$0xff]
    %s48 = scalar_lea.vmem [#allocation2], 33
    %v49 = vld [vmem:[%s48] ss:$2 sm:$0xff]
    %s50 = scalar_lea.vmem [#allocation2], 49
    %v51 = vld [vmem:[%s50] ss:$2 sm:$0xff]
    %s52 = scalar_lea.vmem [#allocation2], 65
    %v53 = vld [vmem:[%s52] ss:$2 sm:$0xff]
    %s54 = scalar_lea.vmem [#allocation2], 81
    %v55 = vld [vmem:[%s54] ss:$2 sm:$0xff]
    %s56 = scalar_lea.vmem [#allocation2], 97
    %v57 = vld [vmem:[%s56] ss:$2 sm:$0xff]
    %s58 = scalar_lea.vmem [#allocation2], 113
    %v59 = vld [vmem:[%s58] ss:$2 sm:$0xff]
    %60 = vst [vmem:[#allocation6] sm:$0xff] %v45
    %61 = vst [vmem:[#allocation6 + $0x8] sm:$0xff] %v47
    %62 = vst [vmem:[#allocation6 + $0x10] sm:$0xff] %v49
    %63 = vst [vmem:[#allocation6 + $0x18] sm:$0xff] %v51
    %64 = vst [vmem:[#allocation6 + $0x20] sm:$0xff] %v53
    %65 = vst [vmem:[#allocation6 + $0x28] sm:$0xff] %v55
    %66 = vst [vmem:[#allocation6 + $0x30] sm:$0xff] %v57
    %67 = vst [vmem:[#allocation6 + $0x38] sm:$0xff] %v59
    %v68 = vld [vmem:[%s44] ss:$2 sm:$0xff]
    %69 = vst [vmem:[#allocation8] sm:$0xff] %v68
    // Predicated region
    $region10: #{tpu_custom_call.1} parent=1 // pred_check
      _
    $region11: #{tpu_custom_call.1} parent=1 // pred_check_branch
      %71 = sbr.rel (0) target = $region13
    $region12: #{tpu_custom_call.1} parent=1 // pred_region
      %s73 = ssub.s32 1024, 1024
      %74 = vsyncadd [#allocation4], %s73
      %s75 = sshll.u32 [#allocation5], 4
      %s76 = int_to_ptr.vmem [resolvable:$true] %s75
      %81 = dma.vmem_to_hbm [thread:$0]  %s76, 1024, %s1, [#allocation4], 128, 128, 8
    $region13: #{tpu_custom_call.1} parent=1 // pred_fallthru
      _
    // Predicated region
    $region14: #{tpu_custom_call.1} parent=1 // pred_check
      _
    $region15: #{tpu_custom_call.1} parent=1 // pred_check_branch
      %83 = sbr.rel (0) target = $region17
    $region16: #{tpu_custom_call.1} parent=1 // pred_region
      %s85 = ssub.s32 1024, 1024
      %86 = vsyncadd [#allocation7], %s85
      %s87 = sshll.u32 [#allocation6], 4
      %s88 = int_to_ptr.vmem [resolvable:$true] %s87
      %93 = dma.vmem_to_hbm [thread:$0]  %s88, 1024, %s2, [#allocation7], 128, 128, 8
    $region17: #{tpu_custom_call.1} parent=1 // pred_fallthru
      _
    // Predicated region
    $region18: #{tpu_custom_call.1} parent=1 // pred_check
      _
    $region19: #{tpu_custom_call.1} parent=1 // pred_check_branch
      %95 = sbr.rel (0) target = $region21
    $region20: #{tpu_custom_call.1} parent=1 // pred_region
      %s97 = ssub.s32 128, 128
      %98 = vsyncadd [#allocation7], %s97
      %s100 = sshll.u32 [#allocation8], 4
      %s101 = int_to_ptr.vmem [resolvable:$true] %s100
      %103 = dma.vmem_to_hbm [thread:$0]  %s101, 128, %s3, [#allocation7]
    $region21: #{tpu_custom_call.1} parent=1 // pred_fallthru
      _
    // Predicated region
    $region22: #{tpu_custom_call.1} parent=1 // pred_check
      _
    $region23: #{tpu_custom_call.1} parent=1 // pred_check_branch
      %105 = sbr.rel (0) target = $region25
    $region24: #{tpu_custom_call.1} parent=1 // pred_region
      %106 = dma.done [#allocation4], 1024
    $region25: #{tpu_custom_call.1} parent=1 // pred_fallthru
      _
    // Predicated region
    $region26: #{tpu_custom_call.1} parent=1 // pred_check
      _
    $region27: #{tpu_custom_call.1} parent=1 // pred_check_branch
      %108 = sbr.rel (0) target = $region29
    $region28: #{tpu_custom_call.1} parent=1 // pred_region
      %109 = dma.done [#allocation7], 1024
    $region29: #{tpu_custom_call.1} parent=1 // pred_fallthru
      _
    // Predicated region
    $region30: #{tpu_custom_call.1} parent=1 // pred_check
      _
    $region31: #{tpu_custom_call.1} parent=1 // pred_check_branch
      %111 = sbr.rel (0) target = $region33
    $region32: #{tpu_custom_call.1} parent=1 // pred_region
      %112 = dma.done [#allocation7], 128
    $region33: #{tpu_custom_call.1} parent=1 // pred_fallthru
      _
    %113 = vsyncpa [#allocation3], 1
    %114 = vsyncpa [#allocation4], 1
    %115 = vsyncpa [#allocation7], 1

// kernel: tpu_custom_call.1
$region0: #{tpu_custom_call.1}
  #allocation0 [shape = 'u32[]', space=smem, size = 0x4, offset = 0x4, fixed_abs, tag = 'smem constant byte address 0x4 - core index']
  #allocation1 [shape = 'u32[144,128]{1,0:T(1,128)}', space=vmem, size = 0x12000, scoped, tag = 'internal scratch']
  %s0 = inlined_call_operand.hbm [shape: f32[8,16,128], index: 0, kind: input, shape index: {}]
  %s1 = inlined_call_operand.hbm [shape: f32[8,16,128], index: 1, kind: output, shape index: {}]
  %s2 = sld [smem:[#allocation0]]
  $region18: #{tpu_custom_call.1} parent=0
    _
  %s4 = ssub.s32 1, %s2
  %s5 = scalar_select 0, %s4, %s2
  $region1: #{tpu_custom_call.1} parent=0
    #allocation2 [shape = 'u8[65536]{0}', space=vmem, size = 0x10000, scoped, tag = 'input window, operand 0, single buffered']
    #allocation3 [shape = 's32[1]{0}', space=sflag, size = 0x4, scoped, tag = 'scoped memory for tpu_custom_call.1']
    #allocation4 [shape = 's32[1]{0}', space=sflag, size = 0x4, scoped, tag = 'scoped memory for tpu_custom_call.1']
    #allocation5 [shape = 'u8[65536]{0}', space=vmem, size = 0x10000, scoped, tag = 'output window, operand 0, single buffered']
    %6 = vsyncpa [#allocation3], 0
    %7 = vsyncpa [#allocation4], 0
    // Predicated region
    $region2: #{tpu_custom_call.1} parent=1 // pred_check
      _
    $region3: #{tpu_custom_call.1} parent=1 // pred_check_branch
      %9 = sbr.rel (0) target = $region5
    $region4: #{tpu_custom_call.1} parent=1 // pred_region
      %s11 = ssub.s32 2048, 2048
      %12 = vsyncadd [#allocation3], %s11
      %s13 = sshll.u32 [#allocation2], 4
      %s14 = int_to_ptr.vmem [resolvable:$true] %s13
      %19 = dma.hbm_to_vmem [thread:$0]  %s0, 2048, %s14, [#allocation3], 128, 128, 8
    $region5: #{tpu_custom_call.1} parent=1 // pred_fallthru
      _
    // Predicated region
    $region6: #{tpu_custom_call.1} parent=1 // pred_check
      _
    $region7: #{tpu_custom_call.1} parent=1 // pred_check_branch
      %21 = sbr.rel (0) target = $region9
    $region8: #{tpu_custom_call.1} parent=1 // pred_region
      %22 = dma.done [#allocation3], 2048
    $region9: #{tpu_custom_call.1} parent=1 // pred_fallthru
      _
    %v23 = vld [vmem:[#allocation2] sm:$0xff]
    %v24 = vld [vmem:[#allocation2 + $0x8] sm:$0xff]
    %v25 = vld [vmem:[#allocation2 + $0x10] sm:$0xff]
    %v26 = vld [vmem:[#allocation2 + $0x18] sm:$0xff]
    %v27 = vld [vmem:[#allocation2 + $0x20] sm:$0xff]
    %v28 = vld [vmem:[#allocation2 + $0x28] sm:$0xff]
    %v29 = vld [vmem:[#allocation2 + $0x30] sm:$0xff]
    %v30 = vld [vmem:[#allocation2 + $0x38] sm:$0xff]
    %v31 = vld [vmem:[#allocation2 + $0x40] sm:$0xff]
    %v32 = vld [vmem:[#allocation2 + $0x48] sm:$0xff]
    %v33 = vld [vmem:[#allocation2 + $0x50] sm:$0xff]
    %v34 = vld [vmem:[#allocation2 + $0x58] sm:$0xff]
    %v35 = vld [vmem:[#allocation2 + $0x60] sm:$0xff]
    %v36 = vld [vmem:[#allocation2 + $0x68] sm:$0xff]
    %v37 = vld [vmem:[#allocation2 + $0x70] sm:$0xff]
    %v38 = vld [vmem:[#allocation2 + $0x78] sm:$0xff]
    %v39 = vrot.slane %v23, 7
    %v40 = vrot.slane %v25, 7
    %v41 = vrot.slane %v27, 7
    %v42 = vrot.slane %v29, 7
    %v43 = vrot.slane %v31, 7
    %v44 = vrot.slane %v33, 7
    %v45 = vrot.slane %v35, 7
    %v46 = vrot.slane %v37, 7
    %v47 = vrot.slane %v24, 7
    %v48 = vrot.slane %v26, 7
    %v49 = vrot.slane %v28, 7
    %v50 = vrot.slane %v30, 7
    %v51 = vrot.slane %v32, 7
    %v52 = vrot.slane %v34, 7
    %v53 = vrot.slane %v36, 7
    %v54 = vrot.slane %v38, 7
    %v55 = vlaneseq
    %v56 = vshrl.u32 %v55, 7
    %vm57 = vcmp.lt.s32.totalorder %v56, 1
    %v58 = vsel %vm57, %v39, %v47
    %v59 = vsel %vm57, %v40, %v48
    %v60 = vsel %vm57, %v41, %v49
    %v61 = vsel %vm57, %v42, %v50
    %v62 = vsel %vm57, %v43, %v51
    %v63 = vsel %vm57, %v44, %v52
    %v64 = vsel %vm57, %v45, %v53
    %v65 = vsel %vm57, %v46, %v54
    %v66 = vsel %vm57, %v47, %v39
    %v67 = vsel %vm57, %v48, %v40
    %v68 = vsel %vm57, %v49, %v41
    %v69 = vsel %vm57, %v50, %v42
    %v70 = vsel %vm57, %v51, %v43
    %v71 = vsel %vm57, %v52, %v44
    %v72 = vsel %vm57, %v53, %v45
    %v73 = vsel %vm57, %v54, %v46
    %74 = vst [vmem:[#allocation5] sm:$0xff] %v66
    %75 = vst [vmem:[#allocation5 + $0x8] sm:$0xff] %v58
    %76 = vst [vmem:[#allocation5 + $0x10] sm:$0xff] %v67
    %77 = vst [vmem:[#allocation5 + $0x18] sm:$0xff] %v59
    %78 = vst [vmem:[#allocation5 + $0x20] sm:$0xff] %v68
    %79 = vst [vmem:[#allocation5 + $0x28] sm:$0xff] %v60
    %80 = vst [vmem:[#allocation5 + $0x30] sm:$0xff] %v69
    %81 = vst [vmem:[#allocation5 + $0x38] sm:$0xff] %v61
    %82 = vst [vmem:[#allocation5 + $0x40] sm:$0xff] %v70
    %83 = vst [vmem:[#allocation5 + $0x48] sm:$0xff] %v62
    %84 = vst [vmem:[#allocation5 + $0x50] sm:$0xff] %v71
    %85 = vst [vmem:[#allocation5 + $0x58] sm:$0xff] %v63
    %86 = vst [vmem:[#allocation5 + $0x60] sm:$0xff] %v72
    %87 = vst [vmem:[#allocation5 + $0x68] sm:$0xff] %v64
    %88 = vst [vmem:[#allocation5 + $0x70] sm:$0xff] %v73
    %89 = vst [vmem:[#allocation5 + $0x78] sm:$0xff] %v65
    // Predicated region
    $region10: #{tpu_custom_call.1} parent=1 // pred_check
      _
    $region11: #{tpu_custom_call.1} parent=1 // pred_check_branch
      %91 = sbr.rel (0) target = $region13
    $region12: #{tpu_custom_call.1} parent=1 // pred_region
      %s93 = ssub.s32 2048, 2048
      %94 = vsyncadd [#allocation4], %s93
      %s95 = sshll.u32 [#allocation5], 4
      %s96 = int_to_ptr.vmem [resolvable:$true] %s95
      %101 = dma.vmem_to_hbm [thread:$0]  %s96, 2048, %s1, [#allocation4], 128, 128, 8
    $region13: #{tpu_custom_call.1} parent=1 // pred_fallthru
      _
    // Predicated region
    $region14: #{tpu_custom_call.1} parent=1 // pred_check
      _
    $region15: #{tpu_custom_call.1} parent=1 // pred_check_branch
      %103 = sbr.rel (0) target = $region17
    $region16: #{tpu_custom_call.1} parent=1 // pred_region
      %104 = dma.done [#allocation4], 2048
    $region17: #{tpu_custom_call.1} parent=1 // pred_fallthru
      _
    %105 = vsyncpa [#allocation3], 1
    %106 = vsyncpa [#allocation4], 1

// kernel: tpu_custom_call.1
$region0: #{tpu_custom_call.1}
  #allocation0 [shape = 'u32[]', space=smem, size = 0x4, offset = 0x4, fixed_abs, tag = 'smem constant byte address 0x4 - core index']
  #allocation1 [shape = 'u32[144,128]{1,0:T(1,128)}', space=vmem, size = 0x12000, scoped, tag = 'internal scratch']
  #allocation2 [shape = 'f32[18,16,32]{2,1,0:T(8,128)}', space=vmem, size = 0x24000, scoped, tag = 'scratch operand']
  %s0 = inlined_call_operand.hbm [shape: f32[2,16,16,32], index: 0, kind: input, shape index: {}]
  %s1 = inlined_call_operand.hbm [shape: f32[2,16,16,32], index: 1, kind: output, shape index: {}]
  %s2 = sld [smem:[#allocation0]]
  $region41: #{tpu_custom_call.1} parent=0
    _
  %s4 = ssub.s32 1, %s2
  %s5 = scalar_select 0, %s4, %s2
  $region1: #{tpu_custom_call.1} parent=0
    #allocation3 [shape = 'u8[262144]{0}', space=vmem, size = 0x40000, scoped, tag = 'input window, operand 0']
    #allocation4 [shape = 's32[2]{0}', space=sflag, size = 0x8, scoped, tag = 'scoped memory for tpu_custom_call.1']
    #allocation5 [shape = 's32[2]{0}', space=sflag, size = 0x8, scoped, tag = 'scoped memory for tpu_custom_call.1']
    #allocation6 [shape = 'u8[262144]{0}', space=vmem, size = 0x40000, scoped, tag = 'output window, operand 0']
    %6 = vsyncpa [#allocation4], 0
    %s7 = scalar_lea.sflag [#allocation4], 1
    %8 = vsyncpa %s7, 0
    %9 = vsyncpa [#allocation5], 0
    %s10 = scalar_lea.sflag [#allocation5], 1
    %11 = vsyncpa %s10, 0
    loop: start=0, step=1, limit=4
    $region2: #{tpu_custom_call.1} parent=1 // loop_pre_header
      _
    $region3: #{tpu_custom_call.1} parent=1 // loop_header
      %s13 = sphi 0, %s17
      %p14 = scmp.ge.s32.totalorder %s13, 4
      %s23 = sphi 0, %s25
      %s26 = sphi 0, %s23
      %s27 = sphi 0, %s26
      %s43 = sphi 0, %s27
      %s49 = sphi 0, %s51
      %s52 = sphi 0, %s49
      %s53 = sphi 0, %s52
      %s69 = sphi 0, %s53
    $region4: #{tpu_custom_call.1} parent=1 // loop_header_branch
      %16 = sbr.rel (%p14) target = $region8
    $region5: #{tpu_custom_call.1} parent=1 // loop_body
      %s18 = ssub.s32 %s13, 1
      %s19 = ssub.s32 %s13, 2
      %s20 = sadd.s32 %s13, 1
      %s21 = ssub.s32 %s13, %s20
      %p22 = scmp.eq.s32.totalorder %s21, 0
      %s24 = sadd.s32 %s23, 1
      %s25 = scalar_select %p22, %s23, %s24
      %p28 = pneg %p22
      %p29 = scmp.eq.s32.totalorder %s13, 1
      %p30 = por %p28, %p29
      %p31 = scmp.ne.s32.totalorder %s23, %s26
      %p32 = scmp.eq.s32.totalorder %s13, 0
      %p33 = por %p31, %p32
      %p34 = scmp.ne.s32.totalorder %s23, %s26
      %p35 = scmp.eq.s32.totalorder %s18, 1
      %p36 = por %p34, %p35
      %p37 = scmp.ne.s32.totalorder %s26, %s27
      %p38 = scmp.eq.s32.totalorder %s18, 0
      %p39 = por %p37, %p38
      %p40 = scmp.ne.s32.totalorder %s26, %s27
      %p41 = scmp.eq.s32.totalorder %s19, 1
      %p42 = por %p40, %p41
      %p44 = scmp.ne.s32.totalorder %s27, %s43
      %p45 = scmp.eq.s32.totalorder %s19, 0
      %p46 = por %p44, %p45
      %s47 = ssub.s32 %s13, %s20
      %p48 = scmp.eq.s32.totalorder %s47, 0
      %s50 = sadd.s32 %s49, 1
      %s51 = scalar_select %p48, %s49, %s50
      %p54 = pneg %p48
      %p55 = scmp.eq.s32.totalorder %s13, 1
      %p56 = por %p54, %p55
      %p57 = scmp.ne.s32.totalorder %s49, %s52
      %p58 = scmp.eq.s32.totalorder %s13, 0
      %p59 = por %p57, %p58
      %p60 = scmp.ne.s32.totalorder %s49, %s52
      %p61 = scmp.eq.s32.totalorder %s18, 1
      %p62 = por %p60, %p61
      %p63 = scmp.ne.s32.totalorder %s52, %s53
      %p64 = scmp.eq.s32.totalorder %s18, 0
      %p65 = por %p63, %p64
      %p66 = scmp.ne.s32.totalorder %s52, %s53
      %p67 = scmp.eq.s32.totalorder %s19, 1
      %p68 = por %p66, %p67
      %p70 = scmp.ne.s32.totalorder %s53, %s69
      %p71 = scmp.eq.s32.totalorder %s19, 0
      %p72 = por %p70, %p71
      %p73 = scmp.le.s32.totalorder 1, %s13
      %p74 = scmp.lt.s32.totalorder %s13, 3
      %p75 = pnand %p73, %p74
      %p76 = pneg %p75
      // Predicated region
      $region9: #{tpu_custom_call.1} parent=5 // pred_check
        _
      $region10: #{tpu_custom_call.1} parent=5 // pred_check_branch
        %78 = sbr.rel (%p75) target = $region12
      $region11: #{tpu_custom_call.1} parent=5 // pred_region
        %s79 = ssub.s32 %s13, 1
      $region12: #{tpu_custom_call.1} parent=5 // pred_fallthru
        _
      %p80 = scmp.lt.s32.totalorder %s13, 2
      // Predicated region
      $region13: #{tpu_custom_call.1} parent=5 // pred_check
        %p81 = pneg %p80
      $region14: #{tpu_custom_call.1} parent=5 // pred_check_branch
        %83 = sbr.rel (%p81) target = $region16
      $region15: #{tpu_custom_call.1} parent=5 // pred_region
        // Predicated region
        $region17: #{tpu_custom_call.1} parent=15 // pred_check
          %p84 = pneg %p33
        $region18: #{tpu_custom_call.1} parent=15 // pred_check_branch
          %86 = sbr.rel (%p84) target = $region20
        $region19: #{tpu_custom_call.1} parent=15 // pred_region
          %s87 = sand.u32 %s23, 1
          %s88 = scalar_lea.sflag [#allocation4], %s87
          %s89 = sand.u32 %s23, 1
          %s90 = smul.addr %s89, 256
          %s91 = scalar_lea.vmem [#allocation3], %s90
          %s93 = ssub.s32 4096, 4096
          %94 = vsyncadd %s88, %s93
          %s95 = smul.addr %s13, 32
          %s96 = smul.addr %s95, 128
          %s97 = scalar_lea.hbm %s0, %s96
          %s98 = sshll.u32 %s91, 4
          %s99 = int_to_ptr.vmem [resolvable:$true] %s98
          %104 = dma.hbm_to_vmem [thread:$0]  %s97, 4096, %s99, %s88, 128, 128, 8
        $region20: #{tpu_custom_call.1} parent=15 // pred_fallthru
          _
      $region16: #{tpu_custom_call.1} parent=5 // pred_fallthru
        _
      %p105 = scmp.le.s32.totalorder 1, %s13
      %p106 = scmp.lt.s32.totalorder %s13, 3
      %p107 = pnand %p105, %p106
      %p108 = pneg %p107
      // Predicated region
      $region21: #{tpu_custom_call.1} parent=5 // pred_check
        _
      $region22: #{tpu_custom_call.1} parent=5 // pred_check_branch
        %110 = sbr.rel (%p107) target = $region24
      $region23: #{tpu_custom_call.1} parent=5 // pred_region
        %s111 = ssub.s32 %s13, 1
        %s112 = sand.u32 %s26, 1
        %s113 = scalar_lea.sflag [#allocation4], %s112
        %s114 = sand.u32 %s26, 1
        %s115 = smul.addr %s114, 256
        %s116 = scalar_lea.vmem [#allocation3], %s115
        // Predicated region
        $region25: #{tpu_custom_call.1} parent=23 // pred_check
          %p117 = pneg %p39
        $region26: #{tpu_custom_call.1} parent=23 // pred_check_branch
          %119 = sbr.rel (%p117) target = $region28
        $region27: #{tpu_custom_call.1} parent=23 // pred_region
          %120 = dma.done %s113, 4096
        $region28: #{tpu_custom_call.1} parent=23 // pred_fallthru
          _
        %s121 = sand.u32 %s26, 1
        %s122 = scalar_lea.sflag [#allocation4], %s121
        %s123 = sand.u32 %s26, 1
        %s124 = smul.addr %s123, 256
        %s125 = scalar_lea.vmem [#allocation3], %s124
        %p126 = pneg %p39
        %p127 = pneg %p36
        %p128 = pneg %p65
        %p129 = pneg %p62
        %s130 = sand.u32 %s52, 1
        %s131 = scalar_lea.sflag [#allocation5], %s130
        %s132 = sand.u32 %s52, 1
        %s133 = smul.addr %s132, 256
        %s134 = scalar_lea.vmem [#allocation6], %s133
        %vm135 = vcmask 261120
        %136 = vst.msk [vmem:[#allocation2] sm:$0xff] %vm135, -3e+38
        %137 = vst.msk [vmem:[#allocation2 + $0x8] sm:$0xff] %vm135, -3e+38
        %s138 = scalar_lea.vmem [#allocation2], 272
        %139 = vst.msk [vmem:[%s138] sm:$0xff] %vm135, -3e+38
        %140 = vst.msk [vmem:[%s138 + $0x8] sm:$0xff] %vm135, -3e+38
        %v141 = vld [vmem:[%s116] sm:$0xff]
        %v142 = vld [vmem:[%s116 + $0x8] sm:$0xff]
        %v143 = vld [vmem:[%s116 + $0x10] sm:$0xff]
        %v144 = vld [vmem:[%s116 + $0x18] sm:$0xff]
        %v145 = vld [vmem:[%s116 + $0x20] sm:$0xff]
        %v146 = vld [vmem:[%s116 + $0x28] sm:$0xff]
        %v147 = vld [vmem:[%s116 + $0x30] sm:$0xff]
        %v148 = vld [vmem:[%s116 + $0x38] sm:$0xff]
        %v149 = vld [vmem:[%s116 + $0x40] sm:$0xff]
        %v150 = vld [vmem:[%s116 + $0x48] sm:$0xff]
        %v151 = vld [vmem:[%s116 + $0x50] sm:$0xff]
        %v152 = vld [vmem:[%s116 + $0x58] sm:$0xff]
        %v153 = vld [vmem:[%s116 + $0x60] sm:$0xff]
        %v154 = vld [vmem:[%s116 + $0x68] sm:$0xff]
        %v155 = vld [vmem:[%s116 + $0x70] sm:$0xff]
        %v156 = vld [vmem:[%s116 + $0x78] sm:$0xff]
        %v157 = vld [vmem:[%s116 + $0x80] sm:$0xff]
        %v158 = vld [vmem:[%s116 + $0x88] sm:$0xff]
        %v159 = vld [vmem:[%s116 + $0x90] sm:$0xff]
        %v160 = vld [vmem:[%s116 + $0x98] sm:$0xff]
        %v161 = vld [vmem:[%s116 + $0xa0] sm:$0xff]
        %v162 = vld [vmem:[%s116 + $0xa8] sm:$0xff]
        %v163 = vld [vmem:[%s116 + $0xb0] sm:$0xff]
        %v164 = vld [vmem:[%s116 + $0xb8] sm:$0xff]
        %v165 = vld [vmem:[%s116 + $0xc0] sm:$0xff]
        %v166 = vld [vmem:[%s116 + $0xc8] sm:$0xff]
        %v167 = vld [vmem:[%s116 + $0xd0] sm:$0xff]
        %v168 = vld [vmem:[%s116 + $0xd8] sm:$0xff]
        %v169 = vld [vmem:[%s116 + $0xe0] sm:$0xff]
        %v170 = vld [vmem:[%s116 + $0xe8] sm:$0xff]
        %v171 = vld [vmem:[%s116 + $0xf0] sm:$0xff]
        %v172 = vld [vmem:[%s116 + $0xf8] sm:$0xff]
        %s173 = scalar_lea.vmem [#allocation2], 16
        %174 = vst.msk [vmem:[%s173] sm:$0xff] %vm135, %v141
        %175 = vst.msk [vmem:[%s173 + $0x8] sm:$0xff] %vm135, %v142
        %176 = vst.msk [vmem:[%s173 + $0x10] sm:$0xff] %vm135, %v143
        %177 = vst.msk [vmem:[%s173 + $0x18] sm:$0xff] %vm135, %v144
        %178 = vst.msk [vmem:[%s173 + $0x20] sm:$0xff] %vm135, %v145
        %179 = vst.msk [vmem:[%s173 + $0x28] sm:$0xff] %vm135, %v146
        %180 = vst.msk [vmem:[%s173 + $0x30] sm:$0xff] %vm135, %v147
        %181 = vst.msk [vmem:[%s173 + $0x38] sm:$0xff] %vm135, %v148
        %182 = vst.msk [vmem:[%s173 + $0x40] sm:$0xff] %vm135, %v149
        %183 = vst.msk [vmem:[%s173 + $0x48] sm:$0xff] %vm135, %v150
        %184 = vst.msk [vmem:[%s173 + $0x50] sm:$0xff] %vm135, %v151
        %185 = vst.msk [vmem:[%s173 + $0x58] sm:$0xff] %vm135, %v152
        %186 = vst.msk [vmem:[%s173 + $0x60] sm:$0xff] %vm135, %v153
        %187 = vst.msk [vmem:[%s173 + $0x68] sm:$0xff] %vm135, %v154
        %188 = vst.msk [vmem:[%s173 + $0x70] sm:$0xff] %vm135, %v155
        %189 = vst.msk [vmem:[%s173 + $0x78] sm:$0xff] %vm135, %v156
        %190 = vst.msk [vmem:[%s173 + $0x80] sm:$0xff] %vm135, %v157
        %191 = vst.msk [vmem:[%s173 + $0x88] sm:$0xff] %vm135, %v158
        %192 = vst.msk [vmem:[%s173 + $0x90] sm:$0xff] %vm135, %v159
        %193 = vst.msk [vmem:[%s173 + $0x98] sm:$0xff] %vm135, %v160
        %194 = vst.msk [vmem:[%s173 + $0xa0] sm:$0xff] %vm135, %v161
        %195 = vst.msk [vmem:[%s173 + $0xa8] sm:$0xff] %vm135, %v162
        %196 = vst.msk [vmem:[%s173 + $0xb0] sm:$0xff] %vm135, %v163
        %197 = vst.msk [vmem:[%s173 + $0xb8] sm:$0xff] %vm135, %v164
        %198 = vst.msk [vmem:[%s173 + $0xc0] sm:$0xff] %vm135, %v165
        %199 = vst.msk [vmem:[%s173 + $0xc8] sm:$0xff] %vm135, %v166
        %200 = vst.msk [vmem:[%s173 + $0xd0] sm:$0xff] %vm135, %v167
        %201 = vst.msk [vmem:[%s173 + $0xd8] sm:$0xff] %vm135, %v168
        %202 = vst.msk [vmem:[%s173 + $0xe0] sm:$0xff] %vm135, %v169
        %203 = vst.msk [vmem:[%s173 + $0xe8] sm:$0xff] %vm135, %v170
        %204 = vst.msk [vmem:[%s173 + $0xf0] sm:$0xff] %vm135, %v171
        %205 = vst.msk [vmem:[%s173 + $0xf8] sm:$0xff] %vm135, %v172
        %v206 = vld [vmem:[#allocation2] sm:$0xff]
        %v207 = vld [vmem:[#allocation2 + $0x8] sm:$0xff]
        %v208 = vld [vmem:[#allocation2 + $0x10] sm:$0xff]
        %v209 = vld [vmem:[#allocation2 + $0x18] sm:$0xff]
        %v210 = vld [vmem:[#allocation2 + $0x20] sm:$0xff]
        %v211 = vld [vmem:[#allocation2 + $0x28] sm:$0xff]
        %v212 = vld [vmem:[#allocation2 + $0x30] sm:$0xff]
        %v213 = vld [vmem:[#allocation2 + $0x38] sm:$0xff]
        %v214 = vld [vmem:[#allocation2 + $0x40] sm:$0xff]
        %v215 = vld [vmem:[#allocation2 + $0x48] sm:$0xff]
        %v216 = vld [vmem:[#allocation2 + $0x50] sm:$0xff]
        %v217 = vld [vmem:[#allocation2 + $0x58] sm:$0xff]
        %v218 = vld [vmem:[#allocation2 + $0x60] sm:$0xff]
        %v219 = vld [vmem:[#allocation2 + $0x68] sm:$0xff]
        %v220 = vld [vmem:[#allocation2 + $0x70] sm:$0xff]
        %v221 = vld [vmem:[#allocation2 + $0x78] sm:$0xff]
        %v222 = vld [vmem:[#allocation2 + $0x80] sm:$0xff]
        %v223 = vld [vmem:[#allocation2 + $0x88] sm:$0xff]
        %v224 = vld [vmem:[#allocation2 + $0x90] sm:$0xff]
        %v225 = vld [vmem:[#allocation2 + $0x98] sm:$0xff]
        %v226 = vld [vmem:[#allocation2 + $0xa0] sm:$0xff]
        %v227 = vld [vmem:[#allocation2 + $0xa8] sm:$0xff]
        %v228 = vld [vmem:[#allocation2 + $0xb0] sm:$0xff]
        %v229 = vld [vmem:[#allocation2 + $0xb8] sm:$0xff]
        %v230 = vld [vmem:[#allocation2 + $0xc0] sm:$0xff]
        %v231 = vld [vmem:[#allocation2 + $0xc8] sm:$0xff]
        %v232 = vld [vmem:[#allocation2 + $0xd0] sm:$0xff]
        %v233 = vld [vmem:[#allocation2 + $0xd8] sm:$0xff]
        %v234 = vld [vmem:[#allocation2 + $0xe0] sm:$0xff]
        %v235 = vld [vmem:[#allocation2 + $0xe8] sm:$0xff]
        %v236 = vld [vmem:[#allocation2 + $0xf0] sm:$0xff]
        %v237 = vld [vmem:[#allocation2 + $0xf8] sm:$0xff]
        %vm270 = vcmask 1040384
        %v271 = vrot.slane %v206, 7
        %v272 = vrot.slane %v207, 7
        %v273 = vsel %vm270, %v271, %v272
        %v274 = vrot.slane %v208, 7
        %v275 = vrot.slane %v209, 7
        %v276 = vsel %vm270, %v274, %v275
        %v277 = vrot.slane %v210, 7
        %v278 = vrot.slane %v211, 7
        %v279 = vsel %vm270, %v277, %v278
        %v280 = vrot.slane %v212, 7
        %v281 = vrot.slane %v213, 7
        %v282 = vsel %vm270, %v280, %v281
        %v283 = vrot.slane %v214, 7
        %v284 = vrot.slane %v215, 7
        %v285 = vsel %vm270, %v283, %v284
        %v286 = vrot.slane %v216, 7
        %v287 = vrot.slane %v217, 7
        %v288 = vsel %vm270, %v286, %v287
        %v289 = vrot.slane %v218, 7
        %v290 = vrot.slane %v219, 7
        %v291 = vsel %vm270, %v289, %v290
        %v292 = vrot.slane %v220, 7
        %v293 = vrot.slane %v221, 7
        %v294 = vsel %vm270, %v292, %v293
        %v295 = vrot.slane %v222, 7
        %v296 = vrot.slane %v223, 7
        %v297 = vsel %vm270, %v295, %v296
        %v298 = vrot.slane %v224, 7
        %v299 = vrot.slane %v225, 7
        %v300 = vsel %vm270, %v298, %v299
        %v301 = vrot.slane %v226, 7
        %v302 = vrot.slane %v227, 7
        %v303 = vsel %vm270, %v301, %v302
        %v304 = vrot.slane %v228, 7
        %v305 = vrot.slane %v229, 7
        %v306 = vsel %vm270, %v304, %v305
        %v307 = vrot.slane %v230, 7
        %v308 = vrot.slane %v231, 7
        %v309 = vsel %vm270, %v307, %v308
        %v310 = vrot.slane %v232, 7
        %v311 = vrot.slane %v233, 7
        %v312 = vsel %vm270, %v310, %v311
        %v313 = vrot.slane %v234, 7
        %v314 = vrot.slane %v235, 7
        %v315 = vsel %vm270, %v313, %v314
        %v316 = vrot.slane %v236, 7
        %v317 = vrot.slane %v237, 7
        %v318 = vsel %vm270, %v316, %v317
        %v351 = vsel %vm270, -3e+38, %v271
        %v352 = vsel %vm270, -3e+38, %v274
        %v353 = vsel %vm270, -3e+38, %v277
        %v354 = vsel %vm270, -3e+38, %v280
        %v355 = vsel %vm270, -3e+38, %v283
        %v356 = vsel %vm270, -3e+38, %v286
        %v357 = vsel %vm270, -3e+38, %v289
        %v358 = vsel %vm270, -3e+38, %v292
        %v359 = vsel %vm270, -3e+38, %v295
        %v360 = vsel %vm270, -3e+38, %v298
        %v361 = vsel %vm270, -3e+38, %v301
        %v362 = vsel %vm270, -3e+38, %v304
        %v363 = vsel %vm270, -3e+38, %v307
        %v364 = vsel %vm270, -3e+38, %v310
        %v365 = vsel %vm270, -3e+38, %v313
        %v366 = vsel %vm270, -3e+38, %v316
        %v367 = vmax.f32 %v351, -3e+38
        %v368 = vmax.f32 %v273, -3e+38
        %v369 = vmax.f32 %v352, -3e+38
        %v370 = vmax.f32 %v276, -3e+38
        %v371 = vmax.f32 %v353, -3e+38
        %v372 = vmax.f32 %v279, -3e+38
        %v373 = vmax.f32 %v354, -3e+38
        %v374 = vmax.f32 %v282, -3e+38
        %v375 = vmax.f32 %v355, -3e+38
        %v376 = vmax.f32 %v285, -3e+38
        %v377 = vmax.f32 %v356, -3e+38
        %v378 = vmax.f32 %v288, -3e+38
        %v379 = vmax.f32 %v357, -3e+38
        %v380 = vmax.f32 %v291, -3e+38
        %v381 = vmax.f32 %v358, -3e+38
        %v382 = vmax.f32 %v294, -3e+38
        %v383 = vmax.f32 %v359, -3e+38
        %v384 = vmax.f32 %v297, -3e+38
        %v385 = vmax.f32 %v360, -3e+38
        %v386 = vmax.f32 %v300, -3e+38
        %v387 = vmax.f32 %v361, -3e+38
        %v388 = vmax.f32 %v303, -3e+38
        %v389 = vmax.f32 %v362, -3e+38
        %v390 = vmax.f32 %v306, -3e+38
        %v391 = vmax.f32 %v363, -3e+38
        %v392 = vmax.f32 %v309, -3e+38
        %v393 = vmax.f32 %v364, -3e+38
        %v394 = vmax.f32 %v312, -3e+38
        %v395 = vmax.f32 %v365, -3e+38
        %v396 = vmax.f32 %v315, -3e+38
        %v397 = vmax.f32 %v366, -3e+38
        %v398 = vmax.f32 %v318, -3e+38
        %v399 = vmax.f32 %v367, %v206
        %v400 = vmax.f32 %v368, %v207
        %v401 = vmax.f32 %v369, %v208
        %v402 = vmax.f32 %v370, %v209
        %v403 = vmax.f32 %v371, %v210
        %v404 = vmax.f32 %v372, %v211
        %v405 = vmax.f32 %v373, %v212
        %v406 = vmax.f32 %v374, %v213
        %v407 = vmax.f32 %v375, %v214
        %v408 = vmax.f32 %v376, %v215
        %v409 = vmax.f32 %v377, %v216
        %v410 = vmax.f32 %v378, %v217
        %v411 = vmax.f32 %v379, %v218
        %v412 = vmax.f32 %v380, %v219
        %v413 = vmax.f32 %v381, %v220
        %v414 = vmax.f32 %v382, %v221
        %v415 = vmax.f32 %v383, %v222
        %v416 = vmax.f32 %v384, %v223
        %v417 = vmax.f32 %v385, %v224
        %v418 = vmax.f32 %v386, %v225
        %v419 = vmax.f32 %v387, %v226
        %v420 = vmax.f32 %v388, %v227
        %v421 = vmax.f32 %v389, %v228
        %v422 = vmax.f32 %v390, %v229
        %v423 = vmax.f32 %v391, %v230
        %v424 = vmax.f32 %v392, %v231
        %v425 = vmax.f32 %v393, %v232
        %v426 = vmax.f32 %v394, %v233
        %v427 = vmax.f32 %v395, %v234
        %v428 = vmax.f32 %v396, %v235
        %v429 = vmax.f32 %v397, %v236
        %v430 = vmax.f32 %v398, %v237
        %vm431 = vcmask 1046528
        %v432 = vrot.slane %v206, 1
        %v433 = vrot.slane %v207, 1
        %v434 = vsel %vm431, %v432, %v433
        %v435 = vrot.slane %v208, 1
        %v436 = vrot.slane %v209, 1
        %v437 = vsel %vm431, %v435, %v436
        %v438 = vrot.slane %v210, 1
        %v439 = vrot.slane %v211, 1
        %v440 = vsel %vm431, %v438, %v439
        %v441 = vrot.slane %v212, 1
        %v442 = vrot.slane %v213, 1
        %v443 = vsel %vm431, %v441, %v442
        %v444 = vrot.slane %v214, 1
        %v445 = vrot.slane %v215, 1
        %v446 = vsel %vm431, %v444, %v445
        %v447 = vrot.slane %v216, 1
        %v448 = vrot.slane %v217, 1
        %v449 = vsel %vm431, %v447, %v448
        %v450 = vrot.slane %v218, 1
        %v451 = vrot.slane %v219, 1
        %v452 = vsel %vm431, %v450, %v451
        %v453 = vrot.slane %v220, 1
        %v454 = vrot.slane %v221, 1
        %v455 = vsel %vm431, %v453, %v454
        %v456 = vrot.slane %v222, 1
        %v457 = vrot.slane %v223, 1
        %v458 = vsel %vm431, %v456, %v457
        %v459 = vrot.slane %v224, 1
        %v460 = vrot.slane %v225, 1
        %v461 = vsel %vm431, %v459, %v460
        %v462 = vrot.slane %v226, 1
        %v463 = vrot.slane %v227, 1
        %v464 = vsel %vm431, %v462, %v463
        %v465 = vrot.slane %v228, 1
        %v466 = vrot.slane %v229, 1
        %v467 = vsel %vm431, %v465, %v466
        %v468 = vrot.slane %v230, 1
        %v469 = vrot.slane %v231, 1
        %v470 = vsel %vm431, %v468, %v469
        %v471 = vrot.slane %v232, 1
        %v472 = vrot.slane %v233, 1
        %v473 = vsel %vm431, %v471, %v472
        %v474 = vrot.slane %v234, 1
        %v475 = vrot.slane %v235, 1
        %v476 = vsel %vm431, %v474, %v475
        %v477 = vrot.slane %v236, 1
        %v478 = vrot.slane %v237, 1
        %v479 = vsel %vm431, %v477, %v478
        %v512 = vsel %vm431, %v433, -3e+38
        %v513 = vsel %vm431, %v436, -3e+38
        %v514 = vsel %vm431, %v439, -3e+38
        %v515 = vsel %vm431, %v442, -3e+38
        %v516 = vsel %vm431, %v445, -3e+38
        %v517 = vsel %vm431, %v448, -3e+38
        %v518 = vsel %vm431, %v451, -3e+38
        %v519 = vsel %vm431, %v454, -3e+38
        %v520 = vsel %vm431, %v457, -3e+38
        %v521 = vsel %vm431, %v460, -3e+38
        %v522 = vsel %vm431, %v463, -3e+38
        %v523 = vsel %vm431, %v466, -3e+38
        %v524 = vsel %vm431, %v469, -3e+38
        %v525 = vsel %vm431, %v472, -3e+38
        %v526 = vsel %vm431, %v475, -3e+38
        %v527 = vsel %vm431, %v478, -3e+38
        %v528 = vmax.f32 %v399, %v434
        %v529 = vmax.f32 %v400, %v512
        %v530 = vmax.f32 %v401, %v437
        %v531 = vmax.f32 %v402, %v513
        %v532 = vmax.f32 %v403, %v440
        %v533 = vmax.f32 %v404, %v514
        %v534 = vmax.f32 %v405, %v443
        %v535 = vmax.f32 %v406, %v515
        %v536 = vmax.f32 %v407, %v446
        %v537 = vmax.f32 %v408, %v516
        %v538 = vmax.f32 %v409, %v449
        %v539 = vmax.f32 %v410, %v517
        %v540 = vmax.f32 %v411, %v452
        %v541 = vmax.f32 %v412, %v518
        %v542 = vmax.f32 %v413, %v455
        %v543 = vmax.f32 %v414, %v519
        %v544 = vmax.f32 %v415, %v458
        %v545 = vmax.f32 %v416, %v520
        %v546 = vmax.f32 %v417, %v461
        %v547 = vmax.f32 %v418, %v521
        %v548 = vmax.f32 %v419, %v464
        %v549 = vmax.f32 %v420, %v522
        %v550 = vmax.f32 %v421, %v467
        %v551 = vmax.f32 %v422, %v523
        %v552 = vmax.f32 %v423, %v470
        %v553 = vmax.f32 %v424, %v524
        %v554 = vmax.f32 %v425, %v473
        %v555 = vmax.f32 %v426, %v525
        %v556 = vmax.f32 %v427, %v476
        %v557 = vmax.f32 %v428, %v526
        %v558 = vmax.f32 %v429, %v479
        %v559 = vmax.f32 %v430, %v527
        %v560 = vld [vmem:[%s173] sm:$0xff]
        %v561 = vld [vmem:[%s173 + $0x8] sm:$0xff]
        %v562 = vld [vmem:[%s173 + $0x10] sm:$0xff]
        %v563 = vld [vmem:[%s173 + $0x18] sm:$0xff]
        %v564 = vld [vmem:[%s173 + $0x20] sm:$0xff]
        %v565 = vld [vmem:[%s173 + $0x28] sm:$0xff]
        %v566 = vld [vmem:[%s173 + $0x30] sm:$0xff]
        %v567 = vld [vmem:[%s173 + $0x38] sm:$0xff]
        %v568 = vld [vmem:[%s173 + $0x40] sm:$0xff]
        %v569 = vld [vmem:[%s173 + $0x48] sm:$0xff]
        %v570 = vld [vmem:[%s173 + $0x50] sm:$0xff]
        %v571 = vld [vmem:[%s173 + $0x58] sm:$0xff]
        %v572 = vld [vmem:[%s173 + $0x60] sm:$0xff]
        %v573 = vld [vmem:[%s173 + $0x68] sm:$0xff]
        %v574 = vld [vmem:[%s173 + $0x70] sm:$0xff]
        %v575 = vld [vmem:[%s173 + $0x78] sm:$0xff]
        %v576 = vld [vmem:[%s173 + $0x80] sm:$0xff]
        %v577 = vld [vmem:[%s173 + $0x88] sm:$0xff]
        %v578 = vld [vmem:[%s173 + $0x90] sm:$0xff]
        %v579 = vld [vmem:[%s173 + $0x98] sm:$0xff]
        %v580 = vld [vmem:[%s173 + $0xa0] sm:$0xff]
        %v581 = vld [vmem:[%s173 + $0xa8] sm:$0xff]
        %v582 = vld [vmem:[%s173 + $0xb0] sm:$0xff]
        %v583 = vld [vmem:[%s173 + $0xb8] sm:$0xff]
        %v584 = vld [vmem:[%s173 + $0xc0] sm:$0xff]
        %v585 = vld [vmem:[%s173 + $0xc8] sm:$0xff]
        %v586 = vld [vmem:[%s173 + $0xd0] sm:$0xff]
        %v587 = vld [vmem:[%s173 + $0xd8] sm:$0xff]
        %v588 = vld [vmem:[%s173 + $0xe0] sm:$0xff]
        %v589 = vld [vmem:[%s173 + $0xe8] sm:$0xff]
        %v590 = vld [vmem:[%s173 + $0xf0] sm:$0xff]
        %v591 = vld [vmem:[%s173 + $0xf8] sm:$0xff]
        %v624 = vrot.slane %v560, 7
        %v625 = vrot.slane %v561, 7
        %v626 = vsel %vm270, %v624, %v625
        %v627 = vrot.slane %v562, 7
        %v628 = vrot.slane %v563, 7
        %v629 = vsel %vm270, %v627, %v628
        %v630 = vrot.slane %v564, 7
        %v631 = vrot.slane %v565, 7
        %v632 = vsel %vm270, %v630, %v631
        %v633 = vrot.slane %v566, 7
        %v634 = vrot.slane %v567, 7
        %v635 = vsel %vm270, %v633, %v634
        %v636 = vrot.slane %v568, 7
        %v637 = vrot.slane %v569, 7
        %v638 = vsel %vm270, %v636, %v637
        %v639 = vrot.slane %v570, 7
        %v640 = vrot.slane %v571, 7
        %v641 = vsel %vm270, %v639, %v640
        %v642 = vrot.slane %v572, 7
        %v643 = vrot.slane %v573, 7
        %v644 = vsel %vm270, %v642, %v643
        %v645 = vrot.slane %v574, 7
        %v646 = vrot.slane %v575, 7
        %v647 = vsel %vm270, %v645, %v646
        %v648 = vrot.slane %v576, 7
        %v649 = vrot.slane %v577, 7
        %v650 = vsel %vm270, %v648, %v649
        %v651 = vrot.slane %v578, 7
        %v652 = vrot.slane %v579, 7
        %v653 = vsel %vm270, %v651, %v652
        %v654 = vrot.slane %v580, 7
        %v655 = vrot.slane %v581, 7
        %v656 = vsel %vm270, %v654, %v655
        %v657 = vrot.slane %v582, 7
        %v658 = vrot.slane %v583, 7
        %v659 = vsel %vm270, %v657, %v658
        %v660 = vrot.slane %v584, 7
        %v661 = vrot.slane %v585, 7
        %v662 = vsel %vm270, %v660, %v661
        %v663 = vrot.slane %v586, 7
        %v664 = vrot.slane %v587, 7
        %v665 = vsel %vm270, %v663, %v664
        %v666 = vrot.slane %v588, 7
        %v667 = vrot.slane %v589, 7
        %v668 = vsel %vm270, %v666, %v667
        %v669 = vrot.slane %v590, 7
        %v670 = vrot.slane %v591, 7
        %v671 = vsel %vm270, %v669, %v670
        %v704 = vsel %vm270, -3e+38, %v624
        %v705 = vsel %vm270, -3e+38, %v627
        %v706 = vsel %vm270, -3e+38, %v630
        %v707 = vsel %vm270, -3e+38, %v633
        %v708 = vsel %vm270, -3e+38, %v636
        %v709 = vsel %vm270, -3e+38, %v639
        %v710 = vsel %vm270, -3e+38, %v642
        %v711 = vsel %vm270, -3e+38, %v645
        %v712 = vsel %vm270, -3e+38, %v648
        %v713 = vsel %vm270, -3e+38, %v651
        %v714 = vsel %vm270, -3e+38, %v654
        %v715 = vsel %vm270, -3e+38, %v657
        %v716 = vsel %vm270, -3e+38, %v660
        %v717 = vsel %vm270, -3e+38, %v663
        %v718 = vsel %vm270, -3e+38, %v666
        %v719 = vsel %vm270, -3e+38, %v669
        %v720 = vmax.f32 %v528, %v704
        %v721 = vmax.f32 %v529, %v626
        %v722 = vmax.f32 %v530, %v705
        %v723 = vmax.f32 %v531, %v629
        %v724 = vmax.f32 %v532, %v706
        %v725 = vmax.f32 %v533, %v632
        %v726 = vmax.f32 %v534, %v707
        %v727 = vmax.f32 %v535, %v635
        %v728 = vmax.f32 %v536, %v708
        %v729 = vmax.f32 %v537, %v638
        %v730 = vmax.f32 %v538, %v709
        %v731 = vmax.f32 %v539, %v641
        %v732 = vmax.f32 %v540, %v710
        %v733 = vmax.f32 %v541, %v644
        %v734 = vmax.f32 %v542, %v711
        %v735 = vmax.f32 %v543, %v647
        %v736 = vmax.f32 %v544, %v712
        %v737 = vmax.f32 %v545, %v650
        %v738 = vmax.f32 %v546, %v713
        %v739 = vmax.f32 %v547, %v653
        %v740 = vmax.f32 %v548, %v714
        %v741 = vmax.f32 %v549, %v656
        %v742 = vmax.f32 %v550, %v715
        %v743 = vmax.f32 %v551, %v659
        %v744 = vmax.f32 %v552, %v716
        %v745 = vmax.f32 %v553, %v662
        %v746 = vmax.f32 %v554, %v717
        %v747 = vmax.f32 %v555, %v665
        %v748 = vmax.f32 %v556, %v718
        %v749 = vmax.f32 %v557, %v668
        %v750 = vmax.f32 %v558, %v719
        %v751 = vmax.f32 %v559, %v671
        %v752 = vmax.f32 %v720, %v560
        %v753 = vmax.f32 %v721, %v561
        %v754 = vmax.f32 %v722, %v562
        %v755 = vmax.f32 %v723, %v563
        %v756 = vmax.f32 %v724, %v564
        %v757 = vmax.f32 %v725, %v565
        %v758 = vmax.f32 %v726, %v566
        %v759 = vmax.f32 %v727, %v567
        %v760 = vmax.f32 %v728, %v568
        %v761 = vmax.f32 %v729, %v569
        %v762 = vmax.f32 %v730, %v570
        %v763 = vmax.f32 %v731, %v571
        %v764 = vmax.f32 %v732, %v572
        %v765 = vmax.f32 %v733, %v573
        %v766 = vmax.f32 %v734, %v574
        %v767 = vmax.f32 %v735, %v575
        %v768 = vmax.f32 %v736, %v576
        %v769 = vmax.f32 %v737, %v577
        %v770 = vmax.f32 %v738, %v578
        %v771 = vmax.f32 %v739, %v579
        %v772 = vmax.f32 %v740, %v580
        %v773 = vmax.f32 %v741, %v581
        %v774 = vmax.f32 %v742, %v582
        %v775 = vmax.f32 %v743, %v583
        %v776 = vmax.f32 %v744, %v584
        %v777 = vmax.f32 %v745, %v585
        %v778 = vmax.f32 %v746, %v586
        %v779 = vmax.f32 %v747, %v587
        %v780 = vmax.f32 %v748, %v588
        %v781 = vmax.f32 %v749, %v589
        %v782 = vmax.f32 %v750, %v590
        %v783 = vmax.f32 %v751, %v591
        %v784 = vrot.slane %v560, 1
        %v785 = vrot.slane %v561, 1
        %v786 = vsel %vm431, %v784, %v785
        %v787 = vrot.slane %v562, 1
        %v788 = vrot.slane %v563, 1
        %v789 = vsel %vm431, %v787, %v788
        %v790 = vrot.slane %v564, 1
        %v791 = vrot.slane %v565, 1
        %v792 = vsel %vm431, %v790, %v791
        %v793 = vrot.slane %v566, 1
        %v794 = vrot.slane %v567, 1
        %v795 = vsel %vm431, %v793, %v794
        %v796 = vrot.slane %v568, 1
        %v797 = vrot.slane %v569, 1
        %v798 = vsel %vm431, %v796, %v797
        %v799 = vrot.slane %v570, 1
        %v800 = vrot.slane %v571, 1
        %v801 = vsel %vm431, %v799, %v800
        %v802 = vrot.slane %v572, 1
        %v803 = vrot.slane %v573, 1
        %v804 = vsel %vm431, %v802, %v803
        %v805 = vrot.slane %v574, 1
        %v806 = vrot.slane %v575, 1
        %v807 = vsel %vm431, %v805, %v806
        %v808 = vrot.slane %v576, 1
        %v809 = vrot.slane %v577, 1
        %v810 = vsel %vm431, %v808, %v809
        %v811 = vrot.slane %v578, 1
        %v812 = vrot.slane %v579, 1
        %v813 = vsel %vm431, %v811, %v812
        %v814 = vrot.slane %v580, 1
        %v815 = vrot.slane %v581, 1
        %v816 = vsel %vm431, %v814, %v815
        %v817 = vrot.slane %v582, 1
        %v818 = vrot.slane %v583, 1
        %v819 = vsel %vm431, %v817, %v818
        %v820 = vrot.slane %v584, 1
        %v821 = vrot.slane %v585, 1
        %v822 = vsel %vm431, %v820, %v821
        %v823 = vrot.slane %v586, 1
        %v824 = vrot.slane %v587, 1
        %v825 = vsel %vm431, %v823, %v824
        %v826 = vrot.slane %v588, 1
        %v827 = vrot.slane %v589, 1
        %v828 = vsel %vm431, %v826, %v827
        %v829 = vrot.slane %v590, 1
        %v830 = vrot.slane %v591, 1
        %v831 = vsel %vm431, %v829, %v830
        %v864 = vsel %vm431, %v785, -3e+38
        %v865 = vsel %vm431, %v788, -3e+38
        %v866 = vsel %vm431, %v791, -3e+38
        %v867 = vsel %vm431, %v794, -3e+38
        %v868 = vsel %vm431, %v797, -3e+38
        %v869 = vsel %vm431, %v800, -3e+38
        %v870 = vsel %vm431, %v803, -3e+38
        %v871 = vsel %vm431, %v806, -3e+38
        %v872 = vsel %vm431, %v809, -3e+38
        %v873 = vsel %vm431, %v812, -3e+38
        %v874 = vsel %vm431, %v815, -3e+38
        %v875 = vsel %vm431, %v818, -3e+38
        %v876 = vsel %vm431, %v821, -3e+38
        %v877 = vsel %vm431, %v824, -3e+38
        %v878 = vsel %vm431, %v827, -3e+38
        %v879 = vsel %vm431, %v830, -3e+38
        %v880 = vmax.f32 %v752, %v786
        %v881 = vmax.f32 %v753, %v864
        %v882 = vmax.f32 %v754, %v789
        %v883 = vmax.f32 %v755, %v865
        %v884 = vmax.f32 %v756, %v792
        %v885 = vmax.f32 %v757, %v866
        %v886 = vmax.f32 %v758, %v795
        %v887 = vmax.f32 %v759, %v867
        %v888 = vmax.f32 %v760, %v798
        %v889 = vmax.f32 %v761, %v868
        %v890 = vmax.f32 %v762, %v801
        %v891 = vmax.f32 %v763, %v869
        %v892 = vmax.f32 %v764, %v804
        %v893 = vmax.f32 %v765, %v870
        %v894 = vmax.f32 %v766, %v807
        %v895 = vmax.f32 %v767, %v871
        %v896 = vmax.f32 %v768, %v810
        %v897 = vmax.f32 %v769, %v872
        %v898 = vmax.f32 %v770, %v813
        %v899 = vmax.f32 %v771, %v873
        %v900 = vmax.f32 %v772, %v816
        %v901 = vmax.f32 %v773, %v874
        %v902 = vmax.f32 %v774, %v819
        %v903 = vmax.f32 %v775, %v875
        %v904 = vmax.f32 %v776, %v822
        %v905 = vmax.f32 %v777, %v876
        %v906 = vmax.f32 %v778, %v825
        %v907 = vmax.f32 %v779, %v877
        %v908 = vmax.f32 %v780, %v828
        %v909 = vmax.f32 %v781, %v878
        %v910 = vmax.f32 %v782, %v831
        %v911 = vmax.f32 %v783, %v879
        %s912 = scalar_lea.vmem [#allocation2], 32
        %v913 = vld [vmem:[%s912] sm:$0xff]
        %v914 = vld [vmem:[%s912 + $0x8] sm:$0xff]
        %v915 = vld [vmem:[%s912 + $0x10] sm:$0xff]
        %v916 = vld [vmem:[%s912 + $0x18] sm:$0xff]
        %v917 = vld [vmem:[%s912 + $0x20] sm:$0xff]
        %v918 = vld [vmem:[%s912 + $0x28] sm:$0xff]
        %v919 = vld [vmem:[%s912 + $0x30] sm:$0xff]
        %v920 = vld [vmem:[%s912 + $0x38] sm:$0xff]
        %v921 = vld [vmem:[%s912 + $0x40] sm:$0xff]
        %v922 = vld [vmem:[%s912 + $0x48] sm:$0xff]
        %v923 = vld [vmem:[%s912 + $0x50] sm:$0xff]
        %v924 = vld [vmem:[%s912 + $0x58] sm:$0xff]
        %v925 = vld [vmem:[%s912 + $0x60] sm:$0xff]
        %v926 = vld [vmem:[%s912 + $0x68] sm:$0xff]
        %v927 = vld [vmem:[%s912 + $0x70] sm:$0xff]
        %v928 = vld [vmem:[%s912 + $0x78] sm:$0xff]
        %v929 = vld [vmem:[%s912 + $0x80] sm:$0xff]
        %v930 = vld [vmem:[%s912 + $0x88] sm:$0xff]
        %v931 = vld [vmem:[%s912 + $0x90] sm:$0xff]
        %v932 = vld [vmem:[%s912 + $0x98] sm:$0xff]
        %v933 = vld [vmem:[%s912 + $0xa0] sm:$0xff]
        %v934 = vld [vmem:[%s912 + $0xa8] sm:$0xff]
        %v935 = vld [vmem:[%s912 + $0xb0] sm:$0xff]
        %v936 = vld [vmem:[%s912 + $0xb8] sm:$0xff]
        %v937 = vld [vmem:[%s912 + $0xc0] sm:$0xff]
        %v938 = vld [vmem:[%s912 + $0xc8] sm:$0xff]
        %v939 = vld [vmem:[%s912 + $0xd0] sm:$0xff]
        %v940 = vld [vmem:[%s912 + $0xd8] sm:$0xff]
        %v941 = vld [vmem:[%s912 + $0xe0] sm:$0xff]
        %v942 = vld [vmem:[%s912 + $0xe8] sm:$0xff]
        %v943 = vld [vmem:[%s912 + $0xf0] sm:$0xff]
        %v944 = vld [vmem:[%s912 + $0xf8] sm:$0xff]
        %v977 = vrot.slane %v913, 7
        %v978 = vrot.slane %v914, 7
        %v979 = vsel %vm270, %v977, %v978
        %v980 = vrot.slane %v915, 7
        %v981 = vrot.slane %v916, 7
        %v982 = vsel %vm270, %v980, %v981
        %v983 = vrot.slane %v917, 7
        %v984 = vrot.slane %v918, 7
        %v985 = vsel %vm270, %v983, %v984
        %v986 = vrot.slane %v919, 7
        %v987 = vrot.slane %v920, 7
        %v988 = vsel %vm270, %v986, %v987
        %v989 = vrot.slane %v921, 7
        %v990 = vrot.slane %v922, 7
        %v991 = vsel %vm270, %v989, %v990
        %v992 = vrot.slane %v923, 7
        %v993 = vrot.slane %v924, 7
        %v994 = vsel %vm270, %v992, %v993
        %v995 = vrot.slane %v925, 7
        %v996 = vrot.slane %v926, 7
        %v997 = vsel %vm270, %v995, %v996
        %v998 = vrot.slane %v927, 7
        %v999 = vrot.slane %v928, 7
        %v1000 = vsel %vm270, %v998, %v999
        %v1001 = vrot.slane %v929, 7
        %v1002 = vrot.slane %v930, 7
        %v1003 = vsel %vm270, %v1001, %v1002
        %v1004 = vrot.slane %v931, 7
        %v1005 = vrot.slane %v932, 7
        %v1006 = vsel %vm270, %v1004, %v1005
        %v1007 = vrot.slane %v933, 7
        %v1008 = vrot.slane %v934, 7
        %v1009 = vsel %vm270, %v1007, %v1008
        %v1010 = vrot.slane %v935, 7
        %v1011 = vrot.slane %v936, 7
        %v1012 = vsel %vm270, %v1010, %v1011
        %v1013 = vrot.slane %v937, 7
        %v1014 = vrot.slane %v938, 7
        %v1015 = vsel %vm270, %v1013, %v1014
        %v1016 = vrot.slane %v939, 7
        %v1017 = vrot.slane %v940, 7
        %v1018 = vsel %vm270, %v1016, %v1017
        %v1019 = vrot.slane %v941, 7
        %v1020 = vrot.slane %v942, 7
        %v1021 = vsel %vm270, %v1019, %v1020
        %v1022 = vrot.slane %v943, 7
        %v1023 = vrot.slane %v944, 7
        %v1024 = vsel %vm270, %v1022, %v1023
        %v1057 = vsel %vm270, -3e+38, %v977
        %v1058 = vsel %vm270, -3e+38, %v980
        %v1059 = vsel %vm270, -3e+38, %v983
        %v1060 = vsel %vm270, -3e+38, %v986
        %v1061 = vsel %vm270, -3e+38, %v989
        %v1062 = vsel %vm270, -3e+38, %v992
        %v1063 = vsel %vm270, -3e+38, %v995
        %v1064 = vsel %vm270, -3e+38, %v998
        %v1065 = vsel %vm270, -3e+38, %v1001
        %v1066 = vsel %vm270, -3e+38, %v1004
        %v1067 = vsel %vm270, -3e+38, %v1007
        %v1068 = vsel %vm270, -3e+38, %v1010
        %v1069 = vsel %vm270, -3e+38, %v1013
        %v1070 = vsel %vm270, -3e+38, %v1016
        %v1071 = vsel %vm270, -3e+38, %v1019
        %v1072 = vsel %vm270, -3e+38, %v1022
        %v1073 = vmax.f32 %v880, %v1057
        %v1074 = vmax.f32 %v881, %v979
        %v1075 = vmax.f32 %v882, %v1058
        %v1076 = vmax.f32 %v883, %v982
        %v1077 = vmax.f32 %v884, %v1059
        %v1078 = vmax.f32 %v885, %v985
        %v1079 = vmax.f32 %v886, %v1060
        %v1080 = vmax.f32 %v887, %v988
        %v1081 = vmax.f32 %v888, %v1061
        %v1082 = vmax.f32 %v889, %v991
        %v1083 = vmax.f32 %v890, %v1062
        %v1084 = vmax.f32 %v891, %v994
        %v1085 = vmax.f32 %v892, %v1063
        %v1086 = vmax.f32 %v893, %v997
        %v1087 = vmax.f32 %v894, %v1064
        %v1088 = vmax.f32 %v895, %v1000
        %v1089 = vmax.f32 %v896, %v1065
        %v1090 = vmax.f32 %v897, %v1003
        %v1091 = vmax.f32 %v898, %v1066
        %v1092 = vmax.f32 %v899, %v1006
        %v1093 = vmax.f32 %v900, %v1067
        %v1094 = vmax.f32 %v901, %v1009
        %v1095 = vmax.f32 %v902, %v1068
        %v1096 = vmax.f32 %v903, %v1012
        %v1097 = vmax.f32 %v904, %v1069
        %v1098 = vmax.f32 %v905, %v1015
        %v1099 = vmax.f32 %v906, %v1070
        %v1100 = vmax.f32 %v907, %v1018
        %v1101 = vmax.f32 %v908, %v1071
        %v1102 = vmax.f32 %v909, %v1021
        %v1103 = vmax.f32 %v910, %v1072
        %v1104 = vmax.f32 %v911, %v1024
        %v1105 = vmax.f32 %v1073, %v913
        %v1106 = vmax.f32 %v1074, %v914
        %v1107 = vmax.f32 %v1075, %v915
        %v1108 = vmax.f32 %v1076, %v916
        %v1109 = vmax.f32 %v1077, %v917
        %v1110 = vmax.f32 %v1078, %v918
        %v1111 = vmax.f32 %v1079, %v919
        %v1112 = vmax.f32 %v1080, %v920
        %v1113 = vmax.f32 %v1081, %v921
        %v1114 = vmax.f32 %v1082, %v922
        %v1115 = vmax.f32 %v1083, %v923
        %v1116 = vmax.f32 %v1084, %v924
        %v1117 = vmax.f32 %v1085, %v925
        %v1118 = vmax.f32 %v1086, %v926
        %v1119 = vmax.f32 %v1087, %v927
        %v1120 = vmax.f32 %v1088, %v928
        %v1121 = vmax.f32 %v1089, %v929
        %v1122 = vmax.f32 %v1090, %v930
        %v1123 = vmax.f32 %v1091, %v931
        %v1124 = vmax.f32 %v1092, %v932
        %v1125 = vmax.f32 %v1093, %v933
        %v1126 = vmax.f32 %v1094, %v934
        %v1127 = vmax.f32 %v1095, %v935
        %v1128 = vmax.f32 %v1096, %v936
        %v1129 = vmax.f32 %v1097, %v937
        %v1130 = vmax.f32 %v1098, %v938
        %v1131 = vmax.f32 %v1099, %v939
        %v1132 = vmax.f32 %v1100, %v940
        %v1133 = vmax.f32 %v1101, %v941
        %v1134 = vmax.f32 %v1102, %v942
        %v1135 = vmax.f32 %v1103, %v943
        %v1136 = vmax.f32 %v1104, %v944
        %v1137 = vrot.slane %v913, 1
        %v1138 = vrot.slane %v914, 1
        %v1139 = vsel %vm431, %v1137, %v1138
        %v1140 = vrot.slane %v915, 1
        %v1141 = vrot.slane %v916, 1
        %v1142 = vsel %vm431, %v1140, %v1141
        %v1143 = vrot.slane %v917, 1
        %v1144 = vrot.slane %v918, 1
        %v1145 = vsel %vm431, %v1143, %v1144
        %v1146 = vrot.slane %v919, 1
        %v1147 = vrot.slane %v920, 1
        %v1148 = vsel %vm431, %v1146, %v1147
        %v1149 = vrot.slane %v921, 1
        %v1150 = vrot.slane %v922, 1
        %v1151 = vsel %vm431, %v1149, %v1150
        %v1152 = vrot.slane %v923, 1
        %v1153 = vrot.slane %v924, 1
        %v1154 = vsel %vm431, %v1152, %v1153
        %v1155 = vrot.slane %v925, 1
        %v1156 = vrot.slane %v926, 1
        %v1157 = vsel %vm431, %v1155, %v1156
        %v1158 = vrot.slane %v927, 1
        %v1159 = vrot.slane %v928, 1
        %v1160 = vsel %vm431, %v1158, %v1159
        %v1161 = vrot.slane %v929, 1
        %v1162 = vrot.slane %v930, 1
        %v1163 = vsel %vm431, %v1161, %v1162
        %v1164 = vrot.slane %v931, 1
        %v1165 = vrot.slane %v932, 1
        %v1166 = vsel %vm431, %v1164, %v1165
        %v1167 = vrot.slane %v933, 1
        %v1168 = vrot.slane %v934, 1
        %v1169 = vsel %vm431, %v1167, %v1168
        %v1170 = vrot.slane %v935, 1
        %v1171 = vrot.slane %v936, 1
        %v1172 = vsel %vm431, %v1170, %v1171
        %v1173 = vrot.slane %v937, 1
        %v1174 = vrot.slane %v938, 1
        %v1175 = vsel %vm431, %v1173, %v1174
        %v1176 = vrot.slane %v939, 1
        %v1177 = vrot.slane %v940, 1
        %v1178 = vsel %vm431, %v1176, %v1177
        %v1179 = vrot.slane %v941, 1
        %v1180 = vrot.slane %v942, 1
        %v1181 = vsel %vm431, %v1179, %v1180
        %v1182 = vrot.slane %v943, 1
        %v1183 = vrot.slane %v944, 1
        %v1184 = vsel %vm431, %v1182, %v1183
        %v1217 = vsel %vm431, %v1138, -3e+38
        %v1218 = vsel %vm431, %v1141, -3e+38
        %v1219 = vsel %vm431, %v1144, -3e+38
        %v1220 = vsel %vm431, %v1147, -3e+38
        %v1221 = vsel %vm431, %v1150, -3e+38
        %v1222 = vsel %vm431, %v1153, -3e+38
        %v1223 = vsel %vm431, %v1156, -3e+38
        %v1224 = vsel %vm431, %v1159, -3e+38
        %v1225 = vsel %vm431, %v1162, -3e+38
        %v1226 = vsel %vm431, %v1165, -3e+38
        %v1227 = vsel %vm431, %v1168, -3e+38
        %v1228 = vsel %vm431, %v1171, -3e+38
        %v1229 = vsel %vm431, %v1174, -3e+38
        %v1230 = vsel %vm431, %v1177, -3e+38
        %v1231 = vsel %vm431, %v1180, -3e+38
        %v1232 = vsel %vm431, %v1183, -3e+38
        %v1233 = vmax.f32 %v1105, %v1139
        %v1234 = vmax.f32 %v1106, %v1217
        %v1235 = vmax.f32 %v1107, %v1142
        %v1236 = vmax.f32 %v1108, %v1218
        %v1237 = vmax.f32 %v1109, %v1145
        %v1238 = vmax.f32 %v1110, %v1219
        %v1239 = vmax.f32 %v1111, %v1148
        %v1240 = vmax.f32 %v1112, %v1220
        %v1241 = vmax.f32 %v1113, %v1151
        %v1242 = vmax.f32 %v1114, %v1221
        %v1243 = vmax.f32 %v1115, %v1154
        %v1244 = vmax.f32 %v1116, %v1222
        %v1245 = vmax.f32 %v1117, %v1157
        %v1246 = vmax.f32 %v1118, %v1223
        %v1247 = vmax.f32 %v1119, %v1160
        %v1248 = vmax.f32 %v1120, %v1224
        %v1249 = vmax.f32 %v1121, %v1163
        %v1250 = vmax.f32 %v1122, %v1225
        %v1251 = vmax.f32 %v1123, %v1166
        %v1252 = vmax.f32 %v1124, %v1226
        %v1253 = vmax.f32 %v1125, %v1169
        %v1254 = vmax.f32 %v1126, %v1227
        %v1255 = vmax.f32 %v1127, %v1172
        %v1256 = vmax.f32 %v1128, %v1228
        %v1257 = vmax.f32 %v1129, %v1175
        %v1258 = vmax.f32 %v1130, %v1229
        %v1259 = vmax.f32 %v1131, %v1178
        %v1260 = vmax.f32 %v1132, %v1230
        %v1261 = vmax.f32 %v1133, %v1181
        %v1262 = vmax.f32 %v1134, %v1231
        %v1263 = vmax.f32 %v1135, %v1184
        %v1264 = vmax.f32 %v1136, %v1232
        %1265 = vst.msk [vmem:[%s134] sm:$0xff] %vm135, %v1233
        %1266 = vst.msk [vmem:[%s134 + $0x8] sm:$0xff] %vm135, %v1234
        %1267 = vst.msk [vmem:[%s134 + $0x10] sm:$0xff] %vm135, %v1235
        %1268 = vst.msk [vmem:[%s134 + $0x18] sm:$0xff] %vm135, %v1236
        %1269 = vst.msk [vmem:[%s134 + $0x20] sm:$0xff] %vm135, %v1237
        %1270 = vst.msk [vmem:[%s134 + $0x28] sm:$0xff] %vm135, %v1238
        %1271 = vst.msk [vmem:[%s134 + $0x30] sm:$0xff] %vm135, %v1239
        %1272 = vst.msk [vmem:[%s134 + $0x38] sm:$0xff] %vm135, %v1240
        %1273 = vst.msk [vmem:[%s134 + $0x40] sm:$0xff] %vm135, %v1241
        %1274 = vst.msk [vmem:[%s134 + $0x48] sm:$0xff] %vm135, %v1242
        %1275 = vst.msk [vmem:[%s134 + $0x50] sm:$0xff] %vm135, %v1243
        %1276 = vst.msk [vmem:[%s134 + $0x58] sm:$0xff] %vm135, %v1244
        %1277 = vst.msk [vmem:[%s134 + $0x60] sm:$0xff] %vm135, %v1245
        %1278 = vst.msk [vmem:[%s134 + $0x68] sm:$0xff] %vm135, %v1246
        %1279 = vst.msk [vmem:[%s134 + $0x70] sm:$0xff] %vm135, %v1247
        %1280 = vst.msk [vmem:[%s134 + $0x78] sm:$0xff] %vm135, %v1248
        %1281 = vst.msk [vmem:[%s134 + $0x80] sm:$0xff] %vm135, %v1249
        %1282 = vst.msk [vmem:[%s134 + $0x88] sm:$0xff] %vm135, %v1250
        %1283 = vst.msk [vmem:[%s134 + $0x90] sm:$0xff] %vm135, %v1251
        %1284 = vst.msk [vmem:[%s134 + $0x98] sm:$0xff] %vm135, %v1252
        %1285 = vst.msk [vmem:[%s134 + $0xa0] sm:$0xff] %vm135, %v1253
        %1286 = vst.msk [vmem:[%s134 + $0xa8] sm:$0xff] %vm135, %v1254
        %1287 = vst.msk [vmem:[%s134 + $0xb0] sm:$0xff] %vm135, %v1255
        %1288 = vst.msk [vmem:[%s134 + $0xb8] sm:$0xff] %vm135, %v1256
        %1289 = vst.msk [vmem:[%s134 + $0xc0] sm:$0xff] %vm135, %v1257
        %1290 = vst.msk [vmem:[%s134 + $0xc8] sm:$0xff] %vm135, %v1258
        %1291 = vst.msk [vmem:[%s134 + $0xd0] sm:$0xff] %vm135, %v1259
        %1292 = vst.msk [vmem:[%s134 + $0xd8] sm:$0xff] %vm135, %v1260
        %1293 = vst.msk [vmem:[%s134 + $0xe0] sm:$0xff] %vm135, %v1261
        %1294 = vst.msk [vmem:[%s134 + $0xe8] sm:$0xff] %vm135, %v1262
        %1295 = vst.msk [vmem:[%s134 + $0xf0] sm:$0xff] %vm135, %v1263
        %1296 = vst.msk [vmem:[%s134 + $0xf8] sm:$0xff] %vm135, %v1264
        %s1297 = sand.u32 %s52, 1
        %s1298 = scalar_lea.sflag [#allocation5], %s1297
        %s1299 = sand.u32 %s52, 1
        %s1300 = smul.addr %s1299, 256
        %s1301 = scalar_lea.vmem [#allocation6], %s1300
        // Predicated region
        $region29: #{tpu_custom_call.1} parent=23 // pred_check
          %p1302 = pneg %p62
        $region30: #{tpu_custom_call.1} parent=23 // pred_check_branch
          %1304 = sbr.rel (%p1302) target = $region32
        $region31: #{tpu_custom_call.1} parent=23 // pred_region
          %s1306 = ssub.s32 4096, 4096
          %1307 = vsyncadd %s1298, %s1306
          %s1308 = smul.addr %s18, 32
          %s1309 = smul.addr %s1308, 128
          %s1310 = scalar_lea.hbm %s1, %s1309
          %s1311 = sshll.u32 %s1301, 4
          %s1312 = int_to_ptr.vmem [resolvable:$true] %s1311
          %1317 = dma.vmem_to_hbm [thread:$0]  %s1312, 4096, %s1310, %s1298, 128, 128, 8
        $region32: #{tpu_custom_call.1} parent=23 // pred_fallthru
          _
      $region24: #{tpu_custom_call.1} parent=5 // pred_fallthru
        _
      %p1318 = scmp.le.s32.totalorder 2, %s13
      // Predicated region
      $region33: #{tpu_custom_call.1} parent=5 // pred_check
        %p1319 = pneg %p1318
      $region34: #{tpu_custom_call.1} parent=5 // pred_check_branch
        %1321 = sbr.rel (%p1319) target = $region36
      $region35: #{tpu_custom_call.1} parent=5 // pred_region
        %s1322 = ssub.s32 %s13, 2
        // Predicated region
        $region37: #{tpu_custom_call.1} parent=35 // pred_check
          %p1323 = pneg %p68
        $region38: #{tpu_custom_call.1} parent=35 // pred_check_branch
          %1325 = sbr.rel (%p1323) target = $region40
        $region39: #{tpu_custom_call.1} parent=35 // pred_region
          %s1326 = sand.u32 %s53, 1
          %s1327 = scalar_lea.sflag [#allocation5], %s1326
          %s1328 = sand.u32 %s53, 1
          %s1329 = smul.addr %s1328, 256
          %s1330 = scalar_lea.vmem [#allocation6], %s1329
          %1331 = dma.done %s1327, 4096
        $region40: #{tpu_custom_call.1} parent=35 // pred_fallthru
          _
      $region36: #{tpu_custom_call.1} parent=5 // pred_fallthru
        _
    $region6: #{tpu_custom_call.1} parent=1 // loop_footer
      %s17 = sadd.s32 1, %s13
    $region7: #{tpu_custom_call.1} parent=1 // loop_footer_branch
      %12 = sbr.rel target = $region3
    $region8: #{tpu_custom_call.1} parent=1 // loop_exit
      _
    %1332 = vsyncpa [#allocation4], 1
    %s1333 = scalar_lea.sflag [#allocation4], 1
    %1334 = vsyncpa %s1333, 1
    %1335 = vsyncpa [#allocation5], 1
    %s1336 = scalar_lea.sflag [#allocation5], 1
    %1337 = vsyncpa %s1336, 1

</llo_original>
